<compile_context>
chip_gen: v5e
topology: v5e:2x2
jax: 0.10.0
libtpu: 0.0.40
codegen_flags: <defaults>
</compile_context>

<pallas_src>
import functools

import jax
import jax.numpy as jnp
import numpy as np
from jax import lax
from jax.experimental import pallas as pl
from jax.experimental.pallas import tpu as pltpu


# ----------------------------------------------------------------------------
# Flat padded-grid geometry
# ----------------------------------------------------------------------------
def _round_up(x, m):
    return ((x + m - 1) // m) * m


def _stage_geom(H, W):
    """Geometry of an (H, W) map stored as a flat zero-padded row-major grid."""
    Hp, Wp = H + 2, W + 2
    S = Hp * Wp                              # valid flat rows (padded grid)
    margin = _round_up(Wp + 1, 8)            # covers the +-(Wp+1) conv tap shifts
    R = min(128, _round_up(S, 8))            # conv chunk rows: 8-aligned, <=128
    nC = -(-S // R)                          # ceil(S / R)
    return dict(H=H, W=W, Hp=Hp, Wp=Wp, S=S, margin=margin, R=R, nC=nC,
                rows=nC * R, alen=margin + nC * R + margin)


# ----------------------------------------------------------------------------
# Conv (3x3, pad=1) + bias + ReLU, K-fused via im2col (stages 2 & 3)
# ----------------------------------------------------------------------------
def _conv_relu_im2col(a_ref, w_ref, b_ref, col_ref, q_ref, *, g):
    # a_ref  : (margin + nC*R + margin, Cin) f32, pad ring zeroed
    # w_ref  : (9*Cin, Cout) bf16 (tap-major rows); col_ref: (R, 9*Cin) f32
    # q_ref  : (nC*R, Cout) f32 conv+ReLU output over all padded-grid rows
    Wp, margin, R, nC = g["Wp"], g["margin"], g["R"], g["nC"]
    Cin = a_ref.shape[-1]
    shifts = tuple((kh - 1) * Wp + (kw - 1) for kh in range(3) for kw in range(3))
    bias = b_ref[...]

    def body(off):
        for k, d in enumerate(shifts):           # short tap loop: keep unrolled
            col_ref[:, k * Cin:(k + 1) * Cin] = a_ref[pl.ds(margin + off + d, R), :]
        acc = jnp.dot(col_ref[...].astype(w_ref.dtype), w_ref[...],
                      preferred_element_type=jnp.float32)
        q_ref[pl.ds(off, R), :] = jnp.maximum(acc + bias, 0.0)

    if nC == 1:
        body(0)
    else:
        def chunk(c, carry):
            body(pl.multiple_of(c * R, 8))
            return carry
        lax.fori_loop(0, nC, chunk, 0)


def _conv_relu_precol(x_ref, w_ref, b_ref, q_ref, *, g):
    """Stage-1 conv: the wrapper already delivered im2col'd rows (K = 9*C)."""
    R, nC = g["R"], g["nC"]
    bias = b_ref[...]

    def body(off):
        lhs = x_ref[0, pl.ds(off, R), :]                       # bf16 (R, 9*C)
        acc = jnp.dot(lhs, w_ref[...], preferred_element_type=jnp.float32)
        q_ref[pl.ds(off, R), :] = jnp.maximum(acc + bias, 0.0)

    if nC == 1:
        body(0)
    else:
        def chunk(c, carry):
            body(pl.multiple_of(c * R, 8))
            return carry
        lax.fori_loop(0, nC, chunk, 0)


# ----------------------------------------------------------------------------
# 2x2 / stride-2 max-pool into the next stage's flat padded grid
# ----------------------------------------------------------------------------
def _maxpool_2x2(q_ref, out_ref, vrow_ref, *, g_in, g_out):
    Wp = g_in["Wp"]
    Hn, Wn, Wpn, mN = g_out["H"], g_out["W"], g_out["Wp"], g_out["margin"]
    C = out_ref.shape[-1]
    out_len = out_ref.shape[0]

    # Zero only what is NOT overwritten: leading margin + top pad row + left pad
    # col of the first interior row ...
    front = mN + Wpn + 1
    out_ref[pl.ds(0, front), :] = jnp.zeros((front, C), out_ref.dtype)

    def row(i, carry):
        top = (2 * i + 1) * Wp
        # vertical max: two contiguous full-width padded rows (VPU)
        v = jnp.maximum(q_ref[pl.ds(top, Wp), :], q_ref[pl.ds(top + Wp, Wp), :])
        vrow_ref[pl.ds(0, Wp), pl.ds(0, C)] = v
        # horizontal max: single strided pass over the halved data
        r0 = vrow_ref[pl.ds(1, Wn, 2), pl.ds(0, C)]
        r1 = vrow_ref[pl.ds(2, Wn, 2), pl.ds(0, C)]
        dst = mN + (i + 1) * Wpn + 1
        out_ref[pl.ds(dst, Wn), :] = jnp.maximum(r0, r1)
        # ... the right pad col of this grid row + left pad col of the next one ...
        out_ref[pl.ds(dst + Wn, 2), :] = jnp.zeros((2, C), out_ref.dtype)
        return carry

    lax.fori_loop(0, Hn, row, 0)

    # ... and the bottom pad row / overcompute / trailing margin.
    tail = mN + (Hn + 1) * Wpn + 1
    out_ref[pl.ds(tail, out_len - tail), :] = jnp.zeros((out_len - tail, C),
                                                        out_ref.dtype)


# ----------------------------------------------------------------------------
# Head: global-average-pool (interior rows only) + Linear + softmax
# ----------------------------------------------------------------------------
def _gap_fc_softmax(a4_ref, wf_ref, bf_ref, o_ref, *, g4):
    H4, W4, Wp4, m4 = g4["H"], g4["W"], g4["Wp"], g4["margin"]
    # Contiguous block covering exactly interior grid rows 1..H4 (pad cols are 0).
    blk = a4_ref[pl.ds(m4 + Wp4, H4 * Wp4), :]
    gap = jnp.sum(blk, axis=0, keepdims=True) * (1.0 / float(H4 * W4))   # (1, C3)
    logits = jnp.dot(gap, wf_ref[...],
                     preferred_element_type=jnp.float32) + bf_ref[...]
    m = jnp.max(logits, axis=-1, keepdims=True)
    e = jnp.exp(logits - m)
    probs = e * pl.reciprocal(jnp.sum(e, axis=-1, keepdims=True), approx=True)
    o_ref[...] = probs.reshape(o_ref.shape)


# ----------------------------------------------------------------------------
# The fused per-image kernel (grid step = one image)
# ----------------------------------------------------------------------------
def _moe_kernel(x_ref, w1_ref, b1_ref, w2_ref, b2_ref, w3_ref, b3_ref,
                wf_ref, bf_ref, o_ref,
                q1, a2, col2, q2, a3, col3, q3, a4, vrow,
                *, g1, g2, g3, g4):
    _conv_relu_precol(x_ref, w1_ref, b1_ref, q1, g=g1)
    _maxpool_2x2(q1, a2, vrow, g_in=g1, g_out=g2)
    _conv_relu_im2col(a2, w2_ref, b2_ref, col2, q2, g=g2)
    _maxpool_2x2(q2, a3, vrow, g_in=g2, g_out=g3)
    _conv_relu_im2col(a3, w3_ref, b3_ref, col3, q3, g=g3)
    _maxpool_2x2(q3, a4, vrow, g_in=g3, g_out=g4)
    _gap_fc_softmax(a4, wf_ref, bf_ref, o_ref, g4=g4)


# ----------------------------------------------------------------------------
# Wrapper: one pallas_call over a batch grid
# ----------------------------------------------------------------------------
def moe_forward_pallas(x_nchw, conv_params, wf, bf, *, matmul_dtype=jnp.bfloat16):
    x = jnp.transpose(x_nchw, (0, 2, 3, 1)).astype(jnp.float32)      # NCHW -> NHWC
    B, H, W, C = x.shape
    assert H % 8 == 0 and W % 8 == 0, "three 2x2 maxpools need H, W % 8 == 0"
    (w1, b1), (w2, b2), (w3, b3) = conv_params
    c1, c2, c3 = w1.shape[-1], w2.shape[-1], w3.shape[-1]
    E = wf.shape[-1]
    assert wf.shape[0] == c3

    g1 = _stage_geom(H, W)
    g2 = _stage_geom(H // 2, W // 2)
    g3 = _stage_geom(H // 4, W // 4)
    g4 = _stage_geom(H // 8, W // 8)

    # --- stage-1 im2col in the wrapper (pure replication / layout plumbing) ---
    Hp, Wp = g1["Hp"], g1["Wp"]
    xpp = jnp.pad(x, ((0, 0), (2, 2), (2, 2), (0, 0)))
    taps = [xpp[:, kh:kh + Hp, kw:kw + Wp, :] for kh in range(3) for kw in range(3)]
    x_col = jnp.concatenate(taps, axis=-1).reshape(B, Hp * Wp, 9 * C)
    x_col = jnp.pad(x_col, ((0, 0), (0, g1["rows"] - Hp * Wp), (0, 0)))
    x_col = x_col.astype(matmul_dtype)

    w1r = w1.reshape(9 * C, c1).astype(matmul_dtype)
    w2r = w2.reshape(9 * c1, c2).astype(matmul_dtype)
    w3r = w3.reshape(9 * c2, c3).astype(matmul_dtype)
    b1r = b1.reshape(1, c1).astype(jnp.float32)
    b2r = b2.reshape(1, c2).astype(jnp.float32)
    b3r = b3.reshape(1, c3).astype(jnp.float32)
    wfr = wf.astype(jnp.float32)                      # tiny FC: keep f32
    bfr = bf.reshape(1, E).astype(jnp.float32)

    in_specs = [
        pl.BlockSpec((1, g1["rows"], 9 * C), lambda b: (b, 0, 0)),   # per-image x
        pl.BlockSpec((9 * C, c1), lambda b: (0, 0)),
        pl.BlockSpec((1, c1), lambda b: (0, 0)),
        pl.BlockSpec((9 * c1, c2), lambda b: (0, 0)),
        pl.BlockSpec((1, c2), lambda b: (0, 0)),
        pl.BlockSpec((9 * c2, c3), lambda b: (0, 0)),
        pl.BlockSpec((1, c3), lambda b: (0, 0)),
        pl.BlockSpec((c3, E), lambda b: (0, 0)),
        pl.BlockSpec((1, E), lambda b: (0, 0)),
    ]
    out_specs = pl.BlockSpec((1, 1, E), lambda b: (b, 0, 0))

    scratch_defs = [
        ((g1["rows"], c1), jnp.float32),                 # q1: conv1+ReLU output
        ((g2["alen"], c1), jnp.float32),                 # a2: pooled padded grid
        ((g2["R"], 9 * c1), jnp.float32),                # col2: im2col (K=288)
        ((g2["rows"], c2), jnp.float32),                 # q2
        ((g3["alen"], c2), jnp.float32),                 # a3
        ((g3["R"], 9 * c2), jnp.float32),                # col3: im2col (K=576)
        ((g3["rows"], c3), jnp.float32),                 # q3
        ((g4["alen"], c3), jnp.float32),                 # a4: final pooled map
        ((g1["Wp"], max(c1, c2, c3)), jnp.float32),      # vrow: pool row buffer
    ]
    scratch_shapes = [pltpu.VMEM(s, d) for s, d in scratch_defs]

    def _nbytes(shape, dt):
        n = np.dtype(dt).itemsize
        for s in shape:
            n *= s
        return n

    scratch_bytes = sum(_nbytes(s, d) for s, d in scratch_defs)
    io_bytes = (2 * _nbytes((g1["rows"], 9 * C), matmul_dtype)        # dbl-buffered x
                + _nbytes(w1r.shape, matmul_dtype) + _nbytes(w2r.shape, matmul_dtype)
                + _nbytes(w3r.shape, matmul_dtype) + _nbytes(wfr.shape, jnp.float32))
    vmem_limit = int(min(100 * 1024 * 1024,
                         max(32 * 1024 * 1024, 2 * (scratch_bytes + io_bytes))))

    kernel = functools.partial(_moe_kernel, g1=g1, g2=g2, g3=g3, g4=g4)
    out = pl.pallas_call(
        kernel,
        grid=(B,),
        in_specs=in_specs,
        out_specs=out_specs,
        out_shape=jax.ShapeDtypeStruct((B, 1, E), jnp.float32),
        scratch_shapes=scratch_shapes,
        compiler_params=pltpu.CompilerParams(
            dimension_semantics=("parallel",),
            vmem_limit_bytes=vmem_limit),
    )(x_col, w1r, b1r, w2r, b2r, w3r, b3r, wfr, bfr)
    return out.reshape(B, E)


# ----------------------------------------------------------------------------
# Pure-JAX reference + parameter init
# ----------------------------------------------------------------------------
def moe_forward_ref(x_nchw, conv_params, wf, bf):
    x = jnp.transpose(x_nchw, (0, 2, 3, 1)).astype(jnp.float32)
    for (w, b) in conv_params:
        x = lax.conv_general_dilated(
            x, w, window_strides=(1, 1), padding="SAME",
            dimension_numbers=("NHWC", "HWIO", "NHWC")) + b
        x = jnp.maximum(x, 0.0)
        x = lax.reduce_window(x, -jnp.inf, lax.max,
                              (1, 2, 2, 1), (1, 2, 2, 1), "VALID")
    gap = jnp.mean(x, axis=(1, 2))
    return jax.nn.softmax(gap @ wf + bf, axis=-1)


def init_params(key, C=3, N_experts=6):
    chans = [(C, 32), (32, 64), (64, 128)]
    conv_params = []
    for cin, cout in chans:
        key, kw_, kb = jax.random.split(key, 3)
        w = jax.random.normal(kw_, (3, 3, cin, cout), jnp.float32) / jnp.sqrt(9.0 * cin)
        b = 0.01 * jax.random.normal(kb, (cout,), jnp.float32)
        conv_params.append((w, b))
    key, kw_, kb = jax.random.split(key, 3)
    wf = jax.random.normal(kw_, (128, N_experts), jnp.float32) / jnp.sqrt(128.0)
    bf = 0.01 * jax.random.normal(kb, (N_experts,), jnp.float32)
    return conv_params, wf, bf


if __name__ == "__main__":
    key = jax.random.PRNGKey(0)
    key, kx = jax.random.split(key)

    B, C, Hs, Ws = 2, 3, 16, 16              # small, divisible by 8 (three pools)
    N_experts = 6
    x = jax.random.normal(kx, (B, C, Hs, Ws), jnp.float32)   # NCHW, like PyTorch

    conv_params, wf, bf = init_params(key, C=C, N_experts=N_experts)

    fwd = jax.jit(moe_forward_pallas)
    out = jax.block_until_ready(fwd(x, conv_params, wf, bf))
    ref = jax.block_until_ready(moe_forward_ref(x, conv_params, wf, bf))

    assert out.shape == (B, N_experts), out.shape
    assert bool(jnp.all(jnp.isfinite(out)))
    assert jnp.allclose(jnp.sum(out, axis=-1), 1.0, atol=2e-3), jnp.sum(out, axis=-1)
    # bf16 MXU operands (f32 accumulation) => slightly looser tolerance than pure f32
    assert jnp.allclose(out, ref, rtol=5e-2, atol=5e-3), (out, ref)

    print("KERNEL_OK")
</pallas_src>

<mosaic_0001>
module attributes {stable_mosaic.version = 11 : i64} {
  func.func @_moe_kernel(%arg0: i32, %arg1: memref<1x384x27xbf16, #tpu.memory_space<vmem>>, %arg2: memref<27x32xbf16, #tpu.memory_space<vmem>>, %arg3: memref<1x32xf32, #tpu.memory_space<vmem>>, %arg4: memref<288x64xbf16, #tpu.memory_space<vmem>>, %arg5: memref<1x64xf32, #tpu.memory_space<vmem>>, %arg6: memref<576x128xbf16, #tpu.memory_space<vmem>>, %arg7: memref<1x128xf32, #tpu.memory_space<vmem>>, %arg8: memref<128x6xf32, #tpu.memory_space<vmem>>, %arg9: memref<1x6xf32, #tpu.memory_space<vmem>>, %arg10: memref<1x1x6xf32, #tpu.memory_space<vmem>>, %arg11: memref<384x32xf32, #tpu.memory_space<vmem>>, %arg12: memref<136x32xf32, #tpu.memory_space<vmem>>, %arg13: memref<104x288xf32, #tpu.memory_space<vmem>>, %arg14: memref<104x64xf32, #tpu.memory_space<vmem>>, %arg15: memref<56x64xf32, #tpu.memory_space<vmem>>, %arg16: memref<40x576xf32, #tpu.memory_space<vmem>>, %arg17: memref<40x128xf32, #tpu.memory_space<vmem>>, %arg18: memref<32x128xf32, #tpu.memory_space<vmem>>, %arg19: memref<18x128xf32, #tpu.memory_space<vmem>>) attributes {dimension_semantics = [#tpu.dimension_semantics<parallel>], iteration_bounds = array<i64: 2>, scalar_prefetch = 0 : i64, scratch_operands = 9 : i64, tpu.core_type = #tpu.core_type<tc>, window_params = [{transform_indices = @transform_0, window_bounds = array<i64: 1, 384, 27>}, {pipeline_mode = #tpu.pipeline_mode<synchronous>, transform_indices = @transform_1, window_bounds = array<i64: 27, 32>}, {pipeline_mode = #tpu.pipeline_mode<synchronous>, transform_indices = @transform_2, window_bounds = array<i64: 1, 32>}, {pipeline_mode = #tpu.pipeline_mode<synchronous>, transform_indices = @transform_3, window_bounds = array<i64: 288, 64>}, {pipeline_mode = #tpu.pipeline_mode<synchronous>, transform_indices = @transform_4, window_bounds = array<i64: 1, 64>}, {pipeline_mode = #tpu.pipeline_mode<synchronous>, transform_indices = @transform_5, window_bounds = array<i64: 576, 128>}, {pipeline_mode = #tpu.pipeline_mode<synchronous>, transform_indices = @transform_6, window_bounds = array<i64: 1, 128>}, {pipeline_mode = #tpu.pipeline_mode<synchronous>, transform_indices = @transform_7, window_bounds = array<i64: 128, 6>}, {pipeline_mode = #tpu.pipeline_mode<synchronous>, transform_indices = @transform_8, window_bounds = array<i64: 1, 6>}, {transform_indices = @transform_9, window_bounds = array<i64: 1, 1, 6>}]} {
    %c0 = arith.constant 0 : index
    %c0_0 = arith.constant 0 : index
    %0 = vector.load %arg3[%c0, %c0_0] : memref<1x32xf32, #tpu.memory_space<vmem>>, vector<1x32xf32>
    %c0_i32 = arith.constant 0 : i32
    %c3_i32 = arith.constant 3 : i32
    %1 = arith.addi %c0_i32, %c3_i32 : i32
    %c1_i32 = arith.constant 1 : i32
    scf.for %arg20 = %c0_i32 to %1 step %c1_i32  : i32 {
      %c128_i32 = arith.constant 128 : i32
      %94 = arith.muli %arg20, %c128_i32 : i32
      %95 = tpu.assume_multiple %94, 8 : i32
      %c0_102 = arith.constant 0 : index
      %96 = arith.index_cast %95 : i32 to index
      %c0_103 = arith.constant 0 : index
      %97 = vector.load %arg1[%c0_102, %96, %c0_103] : memref<1x384x27xbf16, #tpu.memory_space<vmem>>, vector<1x128x27xbf16>
      %98 = vector.shape_cast %97 : vector<1x128x27xbf16> to vector<128x27xbf16>
      %c0_104 = arith.constant 0 : index
      %c0_105 = arith.constant 0 : index
      %99 = vector.load %arg2[%c0_104, %c0_105] : memref<27x32xbf16, #tpu.memory_space<vmem>>, vector<27x32xbf16>
      %cst_106 = arith.constant dense<0.000000e+00> : vector<128x32xf32>
      %100 = tpu.matmul %98, %99, %cst_106 {dimension_numbers = #tpu.dot_dimension_numbers<[1], [0], [0], [1], [0, 0, 1, 1], [], []>} : vector<128x27xbf16>, vector<27x32xbf16>, vector<128x32xf32> -> vector<128x32xf32>
      %101 = vector.broadcast %0 : vector<1x32xf32> to vector<128x32xf32>
      %102 = arith.addf %100, %101 : vector<128x32xf32>
      %cst_107 = arith.constant 0.000000e+00 : f32
      %103 = vector.broadcast %cst_107 : f32 to vector<128x32xf32>
      %104 = arith.maximumf %102, %103 : vector<128x32xf32>
      %105 = arith.index_cast %95 : i32 to index
      %c0_108 = arith.constant 0 : index
      %106 = vector.load %arg11[%105, %c0_108] : memref<384x32xf32, #tpu.memory_space<vmem>>, vector<128x32xf32>
      tpu.vector_store %arg11[%105, %c0_108], %104 {strides = array<i32>} : memref<384x32xf32, #tpu.memory_space<vmem>>, vector<128x32xf32>,
    }
    %c3_i32_1 = arith.constant 3 : i32
    %cst = arith.constant 0.000000e+00 : f32
    %2 = vector.broadcast %cst : f32 to vector<27x32xf32>
    %c0_2 = arith.constant 0 : index
    %c0_3 = arith.constant 0 : index
    %3 = vector.load %arg12[%c0_2, %c0_3] : memref<136x32xf32, #tpu.memory_space<vmem>>, vector<27x32xf32>
    tpu.vector_store %arg12[%c0_2, %c0_3], %2 {strides = array<i32>} : memref<136x32xf32, #tpu.memory_space<vmem>>, vector<27x32xf32>,
    %c0_i32_4 = arith.constant 0 : i32
    %c8_i32 = arith.constant 8 : i32
    %4 = arith.addi %c0_i32_4, %c8_i32 : i32
    %c1_i32_5 = arith.constant 1 : i32
    scf.for %arg20 = %c0_i32_4 to %4 step %c1_i32_5  : i32 {
      %c2_i32_102 = arith.constant 2 : i32
      %94 = arith.muli %c2_i32_102, %arg20 : i32
      %c1_i32_103 = arith.constant 1 : i32
      %95 = arith.addi %94, %c1_i32_103 : i32
      %c18_i32 = arith.constant 18 : i32
      %96 = arith.muli %95, %c18_i32 : i32
      %97 = arith.index_cast %96 : i32 to index
      %c0_104 = arith.constant 0 : index
      %98 = vector.load %arg11[%97, %c0_104] : memref<384x32xf32, #tpu.memory_space<vmem>>, vector<18x32xf32>
      %c18_i32_105 = arith.constant 18 : i32
      %99 = arith.addi %96, %c18_i32_105 : i32
      %100 = arith.index_cast %99 : i32 to index
      %c0_106 = arith.constant 0 : index
      %101 = vector.load %arg11[%100, %c0_106] : memref<384x32xf32, #tpu.memory_space<vmem>>, vector<18x32xf32>
      %102 = arith.maximumf %98, %101 : vector<18x32xf32>
      %c0_107 = arith.constant 0 : index
      %c0_108 = arith.constant 0 : index
      %103 = vector.load %arg19[%c0_107, %c0_108] : memref<18x128xf32, #tpu.memory_space<vmem>>, vector<18x32xf32>
      tpu.vector_store %arg19[%c0_107, %c0_108], %102 {strides = array<i32>} : memref<18x128xf32, #tpu.memory_space<vmem>>, vector<18x32xf32>,
      %c1_109 = arith.constant 1 : index
      %c0_110 = arith.constant 0 : index
      %104 = tpu.strided_load %arg19[%c1_109, %c0_110] {strides = array<i32: 2, 1>} : memref<18x128xf32, #tpu.memory_space<vmem>>, vector<8x32xf32>
      %c2_111 = arith.constant 2 : index
      %c0_112 = arith.constant 0 : index
      %105 = tpu.strided_load %arg19[%c2_111, %c0_112] {strides = array<i32: 2, 1>} : memref<18x128xf32, #tpu.memory_space<vmem>>, vector<8x32xf32>
      %c1_i32_113 = arith.constant 1 : i32
      %106 = arith.addi %arg20, %c1_i32_113 : i32
      %c10_i32 = arith.constant 10 : i32
      %107 = arith.muli %106, %c10_i32 : i32
      %c16_i32 = arith.constant 16 : i32
      %108 = arith.addi %c16_i32, %107 : i32
      %c1_i32_114 = arith.constant 1 : i32
      %109 = arith.addi %108, %c1_i32_114 : i32
      %110 = arith.maximumf %104, %105 : vector<8x32xf32>
      %111 = arith.index_cast %109 : i32 to index
      %c0_115 = arith.constant 0 : index
      %112 = vector.load %arg12[%111, %c0_115] : memref<136x32xf32, #tpu.memory_space<vmem>>, vector<8x32xf32>
      tpu.vector_store %arg12[%111, %c0_115], %110 {strides = array<i32>} : memref<136x32xf32, #tpu.memory_space<vmem>>, vector<8x32xf32>,
      %cst_116 = arith.constant 0.000000e+00 : f32
      %113 = vector.broadcast %cst_116 : f32 to vector<2x32xf32>
      %c8_i32_117 = arith.constant 8 : i32
      %114 = arith.addi %109, %c8_i32_117 : i32
      %115 = arith.index_cast %114 : i32 to index
      %c0_118 = arith.constant 0 : index
      %116 = vector.load %arg12[%115, %c0_118] : memref<136x32xf32, #tpu.memory_space<vmem>>, vector<2x32xf32>
      tpu.vector_store %arg12[%115, %c0_118], %113 {strides = array<i32>} : memref<136x32xf32, #tpu.memory_space<vmem>>, vector<2x32xf32>,
    }
    %c8_i32_6 = arith.constant 8 : i32
    %cst_7 = arith.constant 0.000000e+00 : f32
    %5 = vector.broadcast %cst_7 : f32 to vector<29x32xf32>
    %c107 = arith.constant 107 : index
    %c0_8 = arith.constant 0 : index
    %6 = vector.load %arg12[%c107, %c0_8] : memref<136x32xf32, #tpu.memory_space<vmem>>, vector<29x32xf32>
    tpu.vector_store %arg12[%c107, %c0_8], %5 {strides = array<i32>} : memref<136x32xf32, #tpu.memory_space<vmem>>, vector<29x32xf32>,
    %c0_9 = arith.constant 0 : index
    %c0_10 = arith.constant 0 : index
    %7 = vector.load %arg5[%c0_9, %c0_10] : memref<1x64xf32, #tpu.memory_space<vmem>>, vector<1x64xf32>
    %c5 = arith.constant 5 : index
    %c0_11 = arith.constant 0 : index
    %8 = vector.load %arg12[%c5, %c0_11] : memref<136x32xf32, #tpu.memory_space<vmem>>, vector<104x32xf32>
    %c0_12 = arith.constant 0 : index
    %c0_13 = arith.constant 0 : index
    %9 = vector.load %arg13[%c0_12, %c0_13] : memref<104x288xf32, #tpu.memory_space<vmem>>, vector<104x32xf32>
    tpu.vector_store %arg13[%c0_12, %c0_13], %8 {strides = array<i32>} : memref<104x288xf32, #tpu.memory_space<vmem>>, vector<104x32xf32>,
    %c6 = arith.constant 6 : index
    %c0_14 = arith.constant 0 : index
    %10 = vector.load %arg12[%c6, %c0_14] : memref<136x32xf32, #tpu.memory_space<vmem>>, vector<104x32xf32>
    %c0_15 = arith.constant 0 : index
    %c32 = arith.constant 32 : index
    %11 = vector.load %arg13[%c0_15, %c32] : memref<104x288xf32, #tpu.memory_space<vmem>>, vector<104x32xf32>
    tpu.vector_store %arg13[%c0_15, %c32], %10 {strides = array<i32>} : memref<104x288xf32, #tpu.memory_space<vmem>>, vector<104x32xf32>,
    %c7 = arith.constant 7 : index
    %c0_16 = arith.constant 0 : index
    %12 = vector.load %arg12[%c7, %c0_16] : memref<136x32xf32, #tpu.memory_space<vmem>>, vector<104x32xf32>
    %c0_17 = arith.constant 0 : index
    %c64 = arith.constant 64 : index
    %13 = vector.load %arg13[%c0_17, %c64] : memref<104x288xf32, #tpu.memory_space<vmem>>, vector<104x32xf32>
    tpu.vector_store %arg13[%c0_17, %c64], %12 {strides = array<i32>} : memref<104x288xf32, #tpu.memory_space<vmem>>, vector<104x32xf32>,
    %c15 = arith.constant 15 : index
    %c0_18 = arith.constant 0 : index
    %14 = vector.load %arg12[%c15, %c0_18] : memref<136x32xf32, #tpu.memory_space<vmem>>, vector<104x32xf32>
    %c0_19 = arith.constant 0 : index
    %c96 = arith.constant 96 : index
    %15 = vector.load %arg13[%c0_19, %c96] : memref<104x288xf32, #tpu.memory_space<vmem>>, vector<104x32xf32>
    tpu.vector_store %arg13[%c0_19, %c96], %14 {strides = array<i32>} : memref<104x288xf32, #tpu.memory_space<vmem>>, vector<104x32xf32>,
    %c16 = arith.constant 16 : index
    %c0_20 = arith.constant 0 : index
    %16 = vector.load %arg12[%c16, %c0_20] : memref<136x32xf32, #tpu.memory_space<vmem>>, vector<104x32xf32>
    %c0_21 = arith.constant 0 : index
    %c128 = arith.constant 128 : index
    %17 = vector.load %arg13[%c0_21, %c128] : memref<104x288xf32, #tpu.memory_space<vmem>>, vector<104x32xf32>
    tpu.vector_store %arg13[%c0_21, %c128], %16 {strides = array<i32>} : memref<104x288xf32, #tpu.memory_space<vmem>>, vector<104x32xf32>,
    %c17 = arith.constant 17 : index
    %c0_22 = arith.constant 0 : index
    %18 = vector.load %arg12[%c17, %c0_22] : memref<136x32xf32, #tpu.memory_space<vmem>>, vector<104x32xf32>
    %c0_23 = arith.constant 0 : index
    %c160 = arith.constant 160 : index
    %19 = vector.load %arg13[%c0_23, %c160] : memref<104x288xf32, #tpu.memory_space<vmem>>, vector<104x32xf32>
    tpu.vector_store %arg13[%c0_23, %c160], %18 {strides = array<i32>} : memref<104x288xf32, #tpu.memory_space<vmem>>, vector<104x32xf32>,
    %c25 = arith.constant 25 : index
    %c0_24 = arith.constant 0 : index
    %20 = vector.load %arg12[%c25, %c0_24] : memref<136x32xf32, #tpu.memory_space<vmem>>, vector<104x32xf32>
    %c0_25 = arith.constant 0 : index
    %c192 = arith.constant 192 : index
    %21 = vector.load %arg13[%c0_25, %c192] : memref<104x288xf32, #tpu.memory_space<vmem>>, vector<104x32xf32>
    tpu.vector_store %arg13[%c0_25, %c192], %20 {strides = array<i32>} : memref<104x288xf32, #tpu.memory_space<vmem>>, vector<104x32xf32>,
    %c26 = arith.constant 26 : index
    %c0_26 = arith.constant 0 : index
    %22 = vector.load %arg12[%c26, %c0_26] : memref<136x32xf32, #tpu.memory_space<vmem>>, vector<104x32xf32>
    %c0_27 = arith.constant 0 : index
    %c224 = arith.constant 224 : index
    %23 = vector.load %arg13[%c0_27, %c224] : memref<104x288xf32, #tpu.memory_space<vmem>>, vector<104x32xf32>
    tpu.vector_store %arg13[%c0_27, %c224], %22 {strides = array<i32>} : memref<104x288xf32, #tpu.memory_space<vmem>>, vector<104x32xf32>,
    %c27 = arith.constant 27 : index
    %c0_28 = arith.constant 0 : index
    %24 = vector.load %arg12[%c27, %c0_28] : memref<136x32xf32, #tpu.memory_space<vmem>>, vector<104x32xf32>
    %c0_29 = arith.constant 0 : index
    %c256 = arith.constant 256 : index
    %25 = vector.load %arg13[%c0_29, %c256] : memref<104x288xf32, #tpu.memory_space<vmem>>, vector<104x32xf32>
    tpu.vector_store %arg13[%c0_29, %c256], %24 {strides = array<i32>} : memref<104x288xf32, #tpu.memory_space<vmem>>, vector<104x32xf32>,
    %c0_30 = arith.constant 0 : index
    %c0_31 = arith.constant 0 : index
    %26 = vector.load %arg13[%c0_30, %c0_31] : memref<104x288xf32, #tpu.memory_space<vmem>>, vector<104x288xf32>
    %27 = arith.truncf %26 : vector<104x288xf32> to vector<104x288xbf16>
    %c0_32 = arith.constant 0 : index
    %c0_33 = arith.constant 0 : index
    %28 = vector.load %arg4[%c0_32, %c0_33] : memref<288x64xbf16, #tpu.memory_space<vmem>>, vector<288x64xbf16>
    %cst_34 = arith.constant dense<0.000000e+00> : vector<104x64xf32>
    %29 = tpu.matmul %27, %28, %cst_34 {dimension_numbers = #tpu.dot_dimension_numbers<[1], [0], [0], [1], [0, 0, 1, 1], [], []>} : vector<104x288xbf16>, vector<288x64xbf16>, vector<104x64xf32> -> vector<104x64xf32>
    %30 = vector.broadcast %7 : vector<1x64xf32> to vector<104x64xf32>
    %31 = arith.addf %29, %30 : vector<104x64xf32>
    %cst_35 = arith.constant 0.000000e+00 : f32
    %32 = vector.broadcast %cst_35 : f32 to vector<104x64xf32>
    %33 = arith.maximumf %31, %32 : vector<104x64xf32>
    %c0_36 = arith.constant 0 : index
    %c0_37 = arith.constant 0 : index
    %34 = vector.load %arg14[%c0_36, %c0_37] : memref<104x64xf32, #tpu.memory_space<vmem>>, vector<104x64xf32>
    tpu.vector_store %arg14[%c0_36, %c0_37], %33 {strides = array<i32>} : memref<104x64xf32, #tpu.memory_space<vmem>>, vector<104x64xf32>,
    %cst_38 = arith.constant 0.000000e+00 : f32
    %35 = vector.broadcast %cst_38 : f32 to vector<15x64xf32>
    %c0_39 = arith.constant 0 : index
    %c0_40 = arith.constant 0 : index
    %36 = vector.load %arg15[%c0_39, %c0_40] : memref<56x64xf32, #tpu.memory_space<vmem>>, vector<15x64xf32>
    tpu.vector_store %arg15[%c0_39, %c0_40], %35 {strides = array<i32>} : memref<56x64xf32, #tpu.memory_space<vmem>>, vector<15x64xf32>,
    %c0_i32_41 = arith.constant 0 : i32
    %c4_i32 = arith.constant 4 : i32
    %37 = arith.addi %c0_i32_41, %c4_i32 : i32
    %c1_i32_42 = arith.constant 1 : i32
    scf.for %arg20 = %c0_i32_41 to %37 step %c1_i32_42  : i32 {
      %c2_i32_102 = arith.constant 2 : i32
      %94 = arith.muli %c2_i32_102, %arg20 : i32
      %c1_i32_103 = arith.constant 1 : i32
      %95 = arith.addi %94, %c1_i32_103 : i32
      %c10_i32 = arith.constant 10 : i32
      %96 = arith.muli %95, %c10_i32 : i32
      %97 = arith.index_cast %96 : i32 to index
      %c0_104 = arith.constant 0 : index
      %98 = vector.load %arg14[%97, %c0_104] : memref<104x64xf32, #tpu.memory_space<vmem>>, vector<10x64xf32>
      %c10_i32_105 = arith.constant 10 : i32
      %99 = arith.addi %96, %c10_i32_105 : i32
      %100 = arith.index_cast %99 : i32 to index
      %c0_106 = arith.constant 0 : index
      %101 = vector.load %arg14[%100, %c0_106] : memref<104x64xf32, #tpu.memory_space<vmem>>, vector<10x64xf32>
      %102 = arith.maximumf %98, %101 : vector<10x64xf32>
      %c0_107 = arith.constant 0 : index
      %c0_108 = arith.constant 0 : index
      %103 = vector.load %arg19[%c0_107, %c0_108] : memref<18x128xf32, #tpu.memory_space<vmem>>, vector<10x64xf32>
      tpu.vector_store %arg19[%c0_107, %c0_108], %102 {strides = array<i32>} : memref<18x128xf32, #tpu.memory_space<vmem>>, vector<10x64xf32>,
      %c1_109 = arith.constant 1 : index
      %c0_110 = arith.constant 0 : index
      %104 = tpu.strided_load %arg19[%c1_109, %c0_110] {strides = array<i32: 2, 1>} : memref<18x128xf32, #tpu.memory_space<vmem>>, vector<4x64xf32>
      %c2_111 = arith.constant 2 : index
      %c0_112 = arith.constant 0 : index
      %105 = tpu.strided_load %arg19[%c2_111, %c0_112] {strides = array<i32: 2, 1>} : memref<18x128xf32, #tpu.memory_space<vmem>>, vector<4x64xf32>
      %c1_i32_113 = arith.constant 1 : i32
      %106 = arith.addi %arg20, %c1_i32_113 : i32
      %c6_i32 = arith.constant 6 : i32
      %107 = arith.muli %106, %c6_i32 : i32
      %c8_i32_114 = arith.constant 8 : i32
      %108 = arith.addi %c8_i32_114, %107 : i32
      %c1_i32_115 = arith.constant 1 : i32
      %109 = arith.addi %108, %c1_i32_115 : i32
      %110 = arith.maximumf %104, %105 : vector<4x64xf32>
      %111 = arith.index_cast %109 : i32 to index
      %c0_116 = arith.constant 0 : index
      %112 = vector.load %arg15[%111, %c0_116] : memref<56x64xf32, #tpu.memory_space<vmem>>, vector<4x64xf32>
      tpu.vector_store %arg15[%111, %c0_116], %110 {strides = array<i32>} : memref<56x64xf32, #tpu.memory_space<vmem>>, vector<4x64xf32>,
      %cst_117 = arith.constant 0.000000e+00 : f32
      %113 = vector.broadcast %cst_117 : f32 to vector<2x64xf32>
      %c4_i32_118 = arith.constant 4 : i32
      %114 = arith.addi %109, %c4_i32_118 : i32
      %115 = arith.index_cast %114 : i32 to index
      %c0_119 = arith.constant 0 : index
      %116 = vector.load %arg15[%115, %c0_119] : memref<56x64xf32, #tpu.memory_space<vmem>>, vector<2x64xf32>
      tpu.vector_store %arg15[%115, %c0_119], %113 {strides = array<i32>} : memref<56x64xf32, #tpu.memory_space<vmem>>, vector<2x64xf32>,
    }
    %c4_i32_43 = arith.constant 4 : i32
    %cst_44 = arith.constant 0.000000e+00 : f32
    %38 = vector.broadcast %cst_44 : f32 to vector<17x64xf32>
    %c39 = arith.constant 39 : index
    %c0_45 = arith.constant 0 : index
    %39 = vector.load %arg15[%c39, %c0_45] : memref<56x64xf32, #tpu.memory_space<vmem>>, vector<17x64xf32>
    tpu.vector_store %arg15[%c39, %c0_45], %38 {strides = array<i32>} : memref<56x64xf32, #tpu.memory_space<vmem>>, vector<17x64xf32>,
    %c0_46 = arith.constant 0 : index
    %c0_47 = arith.constant 0 : index
    %40 = vector.load %arg7[%c0_46, %c0_47] : memref<1x128xf32, #tpu.memory_space<vmem>>, vector<1x128xf32>
    %c1 = arith.constant 1 : index
    %c0_48 = arith.constant 0 : index
    %41 = vector.load %arg15[%c1, %c0_48] : memref<56x64xf32, #tpu.memory_space<vmem>>, vector<40x64xf32>
    %c0_49 = arith.constant 0 : index
    %c0_50 = arith.constant 0 : index
    %42 = vector.load %arg16[%c0_49, %c0_50] : memref<40x576xf32, #tpu.memory_space<vmem>>, vector<40x64xf32>
    tpu.vector_store %arg16[%c0_49, %c0_50], %41 {strides = array<i32>} : memref<40x576xf32, #tpu.memory_space<vmem>>, vector<40x64xf32>,
    %c2 = arith.constant 2 : index
    %c0_51 = arith.constant 0 : index
    %43 = vector.load %arg15[%c2, %c0_51] : memref<56x64xf32, #tpu.memory_space<vmem>>, vector<40x64xf32>
    %c0_52 = arith.constant 0 : index
    %c64_53 = arith.constant 64 : index
    %44 = vector.load %arg16[%c0_52, %c64_53] : memref<40x576xf32, #tpu.memory_space<vmem>>, vector<40x64xf32>
    tpu.vector_store %arg16[%c0_52, %c64_53], %43 {strides = array<i32>} : memref<40x576xf32, #tpu.memory_space<vmem>>, vector<40x64xf32>,
    %c3 = arith.constant 3 : index
    %c0_54 = arith.constant 0 : index
    %45 = vector.load %arg15[%c3, %c0_54] : memref<56x64xf32, #tpu.memory_space<vmem>>, vector<40x64xf32>
    %c0_55 = arith.constant 0 : index
    %c128_56 = arith.constant 128 : index
    %46 = vector.load %arg16[%c0_55, %c128_56] : memref<40x576xf32, #tpu.memory_space<vmem>>, vector<40x64xf32>
    tpu.vector_store %arg16[%c0_55, %c128_56], %45 {strides = array<i32>} : memref<40x576xf32, #tpu.memory_space<vmem>>, vector<40x64xf32>,
    %c7_57 = arith.constant 7 : index
    %c0_58 = arith.constant 0 : index
    %47 = vector.load %arg15[%c7_57, %c0_58] : memref<56x64xf32, #tpu.memory_space<vmem>>, vector<40x64xf32>
    %c0_59 = arith.constant 0 : index
    %c192_60 = arith.constant 192 : index
    %48 = vector.load %arg16[%c0_59, %c192_60] : memref<40x576xf32, #tpu.memory_space<vmem>>, vector<40x64xf32>
    tpu.vector_store %arg16[%c0_59, %c192_60], %47 {strides = array<i32>} : memref<40x576xf32, #tpu.memory_space<vmem>>, vector<40x64xf32>,
    %c8 = arith.constant 8 : index
    %c0_61 = arith.constant 0 : index
    %49 = vector.load %arg15[%c8, %c0_61] : memref<56x64xf32, #tpu.memory_space<vmem>>, vector<40x64xf32>
    %c0_62 = arith.constant 0 : index
    %c256_63 = arith.constant 256 : index
    %50 = vector.load %arg16[%c0_62, %c256_63] : memref<40x576xf32, #tpu.memory_space<vmem>>, vector<40x64xf32>
    tpu.vector_store %arg16[%c0_62, %c256_63], %49 {strides = array<i32>} : memref<40x576xf32, #tpu.memory_space<vmem>>, vector<40x64xf32>,
    %c9 = arith.constant 9 : index
    %c0_64 = arith.constant 0 : index
    %51 = vector.load %arg15[%c9, %c0_64] : memref<56x64xf32, #tpu.memory_space<vmem>>, vector<40x64xf32>
    %c0_65 = arith.constant 0 : index
    %c320 = arith.constant 320 : index
    %52 = vector.load %arg16[%c0_65, %c320] : memref<40x576xf32, #tpu.memory_space<vmem>>, vector<40x64xf32>
    tpu.vector_store %arg16[%c0_65, %c320], %51 {strides = array<i32>} : memref<40x576xf32, #tpu.memory_space<vmem>>, vector<40x64xf32>,
    %c13 = arith.constant 13 : index
    %c0_66 = arith.constant 0 : index
    %53 = vector.load %arg15[%c13, %c0_66] : memref<56x64xf32, #tpu.memory_space<vmem>>, vector<40x64xf32>
    %c0_67 = arith.constant 0 : index
    %c384 = arith.constant 384 : index
    %54 = vector.load %arg16[%c0_67, %c384] : memref<40x576xf32, #tpu.memory_space<vmem>>, vector<40x64xf32>
    tpu.vector_store %arg16[%c0_67, %c384], %53 {strides = array<i32>} : memref<40x576xf32, #tpu.memory_space<vmem>>, vector<40x64xf32>,
    %c14 = arith.constant 14 : index
    %c0_68 = arith.constant 0 : index
    %55 = vector.load %arg15[%c14, %c0_68] : memref<56x64xf32, #tpu.memory_space<vmem>>, vector<40x64xf32>
    %c0_69 = arith.constant 0 : index
    %c448 = arith.constant 448 : index
    %56 = vector.load %arg16[%c0_69, %c448] : memref<40x576xf32, #tpu.memory_space<vmem>>, vector<40x64xf32>
    tpu.vector_store %arg16[%c0_69, %c448], %55 {strides = array<i32>} : memref<40x576xf32, #tpu.memory_space<vmem>>, vector<40x64xf32>,
    %c15_70 = arith.constant 15 : index
    %c0_71 = arith.constant 0 : index
    %57 = vector.load %arg15[%c15_70, %c0_71] : memref<56x64xf32, #tpu.memory_space<vmem>>, vector<40x64xf32>
    %c0_72 = arith.constant 0 : index
    %c512 = arith.constant 512 : index
    %58 = vector.load %arg16[%c0_72, %c512] : memref<40x576xf32, #tpu.memory_space<vmem>>, vector<40x64xf32>
    tpu.vector_store %arg16[%c0_72, %c512], %57 {strides = array<i32>} : memref<40x576xf32, #tpu.memory_space<vmem>>, vector<40x64xf32>,
    %c0_73 = arith.constant 0 : index
    %c0_74 = arith.constant 0 : index
    %59 = vector.load %arg16[%c0_73, %c0_74] : memref<40x576xf32, #tpu.memory_space<vmem>>, vector<40x576xf32>
    %60 = arith.truncf %59 : vector<40x576xf32> to vector<40x576xbf16>
    %c0_75 = arith.constant 0 : index
    %c0_76 = arith.constant 0 : index
    %61 = vector.load %arg6[%c0_75, %c0_76] : memref<576x128xbf16, #tpu.memory_space<vmem>>, vector<576x128xbf16>
    %cst_77 = arith.constant dense<0.000000e+00> : vector<40x128xf32>
    %62 = tpu.matmul %60, %61, %cst_77 {dimension_numbers = #tpu.dot_dimension_numbers<[1], [0], [0], [1], [0, 0, 1, 1], [], []>} : vector<40x576xbf16>, vector<576x128xbf16>, vector<40x128xf32> -> vector<40x128xf32>
    %63 = vector.broadcast %40 : vector<1x128xf32> to vector<40x128xf32>
    %64 = arith.addf %62, %63 : vector<40x128xf32>
    %cst_78 = arith.constant 0.000000e+00 : f32
    %65 = vector.broadcast %cst_78 : f32 to vector<40x128xf32>
    %66 = arith.maximumf %64, %65 : vector<40x128xf32>
    %c0_79 = arith.constant 0 : index
    %c0_80 = arith.constant 0 : index
    %67 = vector.load %arg17[%c0_79, %c0_80] : memref<40x128xf32, #tpu.memory_space<vmem>>, vector<40x128xf32>
    tpu.vector_store %arg17[%c0_79, %c0_80], %66 {strides = array<i32>} : memref<40x128xf32, #tpu.memory_space<vmem>>, vector<40x128xf32>,
    %cst_81 = arith.constant 0.000000e+00 : f32
    %68 = vector.broadcast %cst_81 : f32 to vector<13x128xf32>
    %c0_82 = arith.constant 0 : index
    %c0_83 = arith.constant 0 : index
    %69 = vector.load %arg18[%c0_82, %c0_83] : memref<32x128xf32, #tpu.memory_space<vmem>>, vector<13x128xf32>
    tpu.vector_store %arg18[%c0_82, %c0_83], %68 {strides = array<i32>} : memref<32x128xf32, #tpu.memory_space<vmem>>, vector<13x128xf32>,
    %c0_i32_84 = arith.constant 0 : i32
    %c2_i32 = arith.constant 2 : i32
    %70 = arith.addi %c0_i32_84, %c2_i32 : i32
    %c1_i32_85 = arith.constant 1 : i32
    scf.for %arg20 = %c0_i32_84 to %70 step %c1_i32_85  : i32 {
      %c2_i32_102 = arith.constant 2 : i32
      %94 = arith.muli %c2_i32_102, %arg20 : i32
      %c1_i32_103 = arith.constant 1 : i32
      %95 = arith.addi %94, %c1_i32_103 : i32
      %c6_i32 = arith.constant 6 : i32
      %96 = arith.muli %95, %c6_i32 : i32
      %97 = arith.index_cast %96 : i32 to index
      %c0_104 = arith.constant 0 : index
      %98 = vector.load %arg17[%97, %c0_104] : memref<40x128xf32, #tpu.memory_space<vmem>>, vector<6x128xf32>
      %c6_i32_105 = arith.constant 6 : i32
      %99 = arith.addi %96, %c6_i32_105 : i32
      %100 = arith.index_cast %99 : i32 to index
      %c0_106 = arith.constant 0 : index
      %101 = vector.load %arg17[%100, %c0_106] : memref<40x128xf32, #tpu.memory_space<vmem>>, vector<6x128xf32>
      %102 = arith.maximumf %98, %101 : vector<6x128xf32>
      %c0_107 = arith.constant 0 : index
      %c0_108 = arith.constant 0 : index
      %103 = vector.load %arg19[%c0_107, %c0_108] : memref<18x128xf32, #tpu.memory_space<vmem>>, vector<6x128xf32>
      tpu.vector_store %arg19[%c0_107, %c0_108], %102 {strides = array<i32>} : memref<18x128xf32, #tpu.memory_space<vmem>>, vector<6x128xf32>,
      %c1_109 = arith.constant 1 : index
      %c0_110 = arith.constant 0 : index
      %104 = tpu.strided_load %arg19[%c1_109, %c0_110] {strides = array<i32: 2, 1>} : memref<18x128xf32, #tpu.memory_space<vmem>>, vector<2x128xf32>
      %c2_111 = arith.constant 2 : index
      %c0_112 = arith.constant 0 : index
      %105 = tpu.strided_load %arg19[%c2_111, %c0_112] {strides = array<i32: 2, 1>} : memref<18x128xf32, #tpu.memory_space<vmem>>, vector<2x128xf32>
      %c1_i32_113 = arith.constant 1 : i32
      %106 = arith.addi %arg20, %c1_i32_113 : i32
      %c4_i32_114 = arith.constant 4 : i32
      %107 = arith.muli %106, %c4_i32_114 : i32
      %c8_i32_115 = arith.constant 8 : i32
      %108 = arith.addi %c8_i32_115, %107 : i32
      %c1_i32_116 = arith.constant 1 : i32
      %109 = arith.addi %108, %c1_i32_116 : i32
      %110 = arith.maximumf %104, %105 : vector<2x128xf32>
      %111 = arith.index_cast %109 : i32 to index
      %c0_117 = arith.constant 0 : index
      %112 = vector.load %arg18[%111, %c0_117] : memref<32x128xf32, #tpu.memory_space<vmem>>, vector<2x128xf32>
      tpu.vector_store %arg18[%111, %c0_117], %110 {strides = array<i32>} : memref<32x128xf32, #tpu.memory_space<vmem>>, vector<2x128xf32>,
      %cst_118 = arith.constant 0.000000e+00 : f32
      %113 = vector.broadcast %cst_118 : f32 to vector<2x128xf32>
      %c2_i32_119 = arith.constant 2 : i32
      %114 = arith.addi %109, %c2_i32_119 : i32
      %115 = arith.index_cast %114 : i32 to index
      %c0_120 = arith.constant 0 : index
      %116 = vector.load %arg18[%115, %c0_120] : memref<32x128xf32, #tpu.memory_space<vmem>>, vector<2x128xf32>
      tpu.vector_store %arg18[%115, %c0_120], %113 {strides = array<i32>} : memref<32x128xf32, #tpu.memory_space<vmem>>, vector<2x128xf32>,
    }
    %c2_i32_86 = arith.constant 2 : i32
    %cst_87 = arith.constant 0.000000e+00 : f32
    %71 = vector.broadcast %cst_87 : f32 to vector<11x128xf32>
    %c21 = arith.constant 21 : index
    %c0_88 = arith.constant 0 : index
    %72 = vector.load %arg18[%c21, %c0_88] : memref<32x128xf32, #tpu.memory_space<vmem>>, vector<11x128xf32>
    tpu.vector_store %arg18[%c21, %c0_88], %71 {strides = array<i32>} : memref<32x128xf32, #tpu.memory_space<vmem>>, vector<11x128xf32>,
    %c12 = arith.constant 12 : index
    %c0_89 = arith.constant 0 : index
    %73 = vector.load %arg18[%c12, %c0_89] : memref<32x128xf32, #tpu.memory_space<vmem>>, vector<8x128xf32>
    %cst_90 = arith.constant dense<0.000000e+00> : vector<128xf32>
    %74 = vector.multi_reduction <add>, %73, %cst_90 [0] : vector<8x128xf32> to vector<128xf32>
    %75 = vector.shape_cast %74 : vector<128xf32> to vector<1x128xf32>
    %cst_91 = arith.constant 2.500000e-01 : f32
    %76 = vector.broadcast %cst_91 : f32 to vector<1x128xf32>
    %77 = arith.mulf %75, %76 : vector<1x128xf32>
    %c0_92 = arith.constant 0 : index
    %c0_93 = arith.constant 0 : index
    %78 = vector.load %arg8[%c0_92, %c0_93] : memref<128x6xf32, #tpu.memory_space<vmem>>, vector<128x6xf32>
    %cst_94 = arith.constant dense<0.000000e+00> : vector<1x6xf32>
    %79 = tpu.matmul %77, %78, %cst_94 {dimension_numbers = #tpu.dot_dimension_numbers<[1], [0], [0], [1], [0, 0, 1, 1], [], []>} : vector<1x128xf32>, vector<128x6xf32>, vector<1x6xf32> -> vector<1x6xf32>
    %c0_95 = arith.constant 0 : index
    %c0_96 = arith.constant 0 : index
    %80 = vector.load %arg9[%c0_95, %c0_96] : memref<1x6xf32, #tpu.memory_space<vmem>>, vector<1x6xf32>
    %81 = arith.addf %79, %80 : vector<1x6xf32>
    %cst_97 = arith.constant dense<0xFF800000> : vector<1xf32>
    %82 = vector.multi_reduction <maximumf>, %81, %cst_97 [1] : vector<1x6xf32> to vector<1xf32>
    %83 = vector.shape_cast %82 : vector<1xf32> to vector<1x1xf32>
    %84 = vector.broadcast %83 : vector<1x1xf32> to vector<1x6xf32>
    %85 = arith.subf %81, %84 : vector<1x6xf32>
    %86 = math.exp %85 : vector<1x6xf32>
    %cst_98 = arith.constant dense<0.000000e+00> : vector<1xf32>
    %87 = vector.multi_reduction <add>, %86, %cst_98 [1] : vector<1x6xf32> to vector<1xf32>
    %88 = vector.shape_cast %87 : vector<1xf32> to vector<1x1xf32>
    %89 = tpu.reciprocal %88 {approx = true} : vector<1x1xf32> -> vector<1x1xf32>
    %90 = vector.broadcast %89 : vector<1x1xf32> to vector<1x6xf32>
    %91 = arith.mulf %86, %90 : vector<1x6xf32>
    %92 = vector.shape_cast %91 : vector<1x6xf32> to vector<1x1x6xf32>
    %c0_99 = arith.constant 0 : index
    %c0_100 = arith.constant 0 : index
    %c0_101 = arith.constant 0 : index
    %93 = vector.load %arg10[%c0_99, %c0_100, %c0_101] : memref<1x1x6xf32, #tpu.memory_space<vmem>>, vector<1x1x6xf32>
    tpu.vector_store %arg10[%c0_99, %c0_100, %c0_101], %92 {strides = array<i32>} : memref<1x1x6xf32, #tpu.memory_space<vmem>>, vector<1x1x6xf32>,
    return
  }
  func.func @transform_0(%arg0: i32) -> (i32, i32, i32) {
    %c0_i32 = arith.constant 0 : i32
    %c0_i32_0 = arith.constant 0 : i32
    %c0_i32_1 = arith.constant 0 : i32
    return %arg0, %c0_i32, %c0_i32_0 : i32, i32, i32
  }
  func.func @transform_1(%arg0: i32) -> (i32, i32) {
    %c0_i32 = arith.constant 0 : i32
    %c0_i32_0 = arith.constant 0 : i32
    %c0_i32_1 = arith.constant 0 : i32
    return %c0_i32, %c0_i32_0 : i32, i32
  }
  func.func @transform_2(%arg0: i32) -> (i32, i32) {
    %c0_i32 = arith.constant 0 : i32
    %c0_i32_0 = arith.constant 0 : i32
    %c0_i32_1 = arith.constant 0 : i32
    return %c0_i32, %c0_i32_0 : i32, i32
  }
  func.func @transform_3(%arg0: i32) -> (i32, i32) {
    %c0_i32 = arith.constant 0 : i32
    %c0_i32_0 = arith.constant 0 : i32
    %c0_i32_1 = arith.constant 0 : i32
    return %c0_i32, %c0_i32_0 : i32, i32
  }
  func.func @transform_4(%arg0: i32) -> (i32, i32) {
    %c0_i32 = arith.constant 0 : i32
    %c0_i32_0 = arith.constant 0 : i32
    %c0_i32_1 = arith.constant 0 : i32
    return %c0_i32, %c0_i32_0 : i32, i32
  }
  func.func @transform_5(%arg0: i32) -> (i32, i32) {
    %c0_i32 = arith.constant 0 : i32
    %c0_i32_0 = arith.constant 0 : i32
    %c0_i32_1 = arith.constant 0 : i32
    return %c0_i32, %c0_i32_0 : i32, i32
  }
  func.func @transform_6(%arg0: i32) -> (i32, i32) {
    %c0_i32 = arith.constant 0 : i32
    %c0_i32_0 = arith.constant 0 : i32
    %c0_i32_1 = arith.constant 0 : i32
    return %c0_i32, %c0_i32_0 : i32, i32
  }
  func.func @transform_7(%arg0: i32) -> (i32, i32) {
    %c0_i32 = arith.constant 0 : i32
    %c0_i32_0 = arith.constant 0 : i32
    %c0_i32_1 = arith.constant 0 : i32
    return %c0_i32, %c0_i32_0 : i32, i32
  }
  func.func @transform_8(%arg0: i32) -> (i32, i32) {
    %c0_i32 = arith.constant 0 : i32
    %c0_i32_0 = arith.constant 0 : i32
    %c0_i32_1 = arith.constant 0 : i32
    return %c0_i32, %c0_i32_0 : i32, i32
  }
  func.func @transform_9(%arg0: i32) -> (i32, i32, i32) {
    %c0_i32 = arith.constant 0 : i32
    %c0_i32_0 = arith.constant 0 : i32
    %c0_i32_1 = arith.constant 0 : i32
    return %arg0, %c0_i32, %c0_i32_0 : i32, i32, i32
  }
}

</mosaic_0001>

<llo_original>
// kernel: moe_forward_pallas.1
$region0: #{moe_forward_pallas.1}
  #allocation0 [shape = 'u32[]', space=smem, size = 0x4, offset = 0x4, fixed_abs, tag = 'smem constant byte address 0x4 - core index']
  #allocation1 [shape = 'u32[72,128]{1,0:T(1,128)}', space=vmem, size = 0x9000, scoped, tag = 'internal scratch']
  #allocation2 [shape = 'f32[384,32]{1,0:T(8,128)}', space=vmem, size = 0x30000, scoped, tag = 'scratch operand']
  #allocation3 [shape = 'f32[136,32]{1,0:T(8,128)}', space=vmem, size = 0x11000, scoped, tag = 'scratch operand']
  #allocation4 [shape = 'f32[104,288]{1,0:T(8,128)}', space=vmem, size = 0x27000, scoped, tag = 'scratch operand']
  #allocation5 [shape = 'f32[104,64]{1,0:T(8,128)}', space=vmem, size = 0xd000, scoped, tag = 'scratch operand']
  #allocation6 [shape = 'f32[56,64]{1,0:T(8,128)}', space=vmem, size = 0x7000, scoped, tag = 'scratch operand']
  #allocation7 [shape = 'f32[40,576]{1,0:T(8,128)}', space=vmem, size = 0x19000, scoped, tag = 'scratch operand']
  #allocation8 [shape = 'f32[40,128]{1,0:T(8,128)}', space=vmem, size = 0x5000, scoped, tag = 'scratch operand']
  #allocation9 [shape = 'f32[32,128]{1,0:T(8,128)}', space=vmem, size = 0x4000, scoped, tag = 'scratch operand']
  #allocation10 [shape = 'f32[18,128]{1,0:T(8,128)}', space=vmem, size = 0x3000, scoped, tag = 'scratch operand']
  %s0 = inlined_call_operand.vmem [shape: bf16[2,384,27], index: 0, kind: input, shape index: {}]
  %s1 = inlined_call_operand.vmem [shape: bf16[27,32], index: 1, kind: input, shape index: {}]
  %s2 = inlined_call_operand.vmem [shape: f32[1,32], index: 2, kind: input, shape index: {}]
  %s3 = inlined_call_operand.vmem [shape: bf16[288,64], index: 3, kind: input, shape index: {}]
  %s4 = inlined_call_operand.vmem [shape: f32[1,64], index: 4, kind: input, shape index: {}]
  %s5 = inlined_call_operand.vmem [shape: bf16[576,128], index: 5, kind: input, shape index: {}]
  %s6 = inlined_call_operand.vmem [shape: f32[1,128], index: 6, kind: input, shape index: {}]
  %s7 = inlined_call_operand.vmem [shape: f32[128,6], index: 7, kind: input, shape index: {}]
  %s8 = inlined_call_operand.vmem [shape: f32[1,6], index: 8, kind: input, shape index: {}]
  %s9 = inlined_call_operand.hbm [shape: f32[2,1,6], index: 9, kind: output, shape index: {}]
  %s10 = sld [smem:[#allocation0]]
  $region97: #{moe_forward_pallas.1} parent=0
    _
  %s12 = ssub.s32 1, %s10
  %s13 = scalar_select 0, %s12, %s10
  $region1: #{moe_forward_pallas.1} parent=0
    #allocation11 [shape = 'u8[1024]{0}', space=vmem, size = 0x400, scoped, tag = 'output window, operand 0']
    #allocation12 [shape = 's32[2]{0}', space=sflag, size = 0x8, scoped, tag = 'scoped memory for moe_forward_pallas.1']
    %14 = vsyncpa [#allocation12], 0
    %s15 = scalar_lea.sflag [#allocation12], 1
    %16 = vsyncpa %s15, 0
    loop: start=0, step=1, limit=4
    $region2: #{moe_forward_pallas.1} parent=1 // loop_pre_header
      _
    $region3: #{moe_forward_pallas.1} parent=1 // loop_header
      %s18 = sphi 0, %s22
      %p19 = scmp.ge.s32.totalorder %s18, 4
      %s28 = sphi 0, %s30
      %s31 = sphi 0, %s28
      %s32 = sphi 0, %s31
      %s48 = sphi 0, %s32
      %s52 = sphi 0, %s52
      %s54 = sphi 0, %s52
      %s55 = sphi 0, %s54
      %s69 = sphi 0, %s55
      %s73 = sphi 0, %s73
      %s75 = sphi 0, %s73
      %s76 = sphi 0, %s75
      %s90 = sphi 0, %s76
      %s94 = sphi 0, %s94
      %s96 = sphi 0, %s94
      %s97 = sphi 0, %s96
      %s111 = sphi 0, %s97
      %s115 = sphi 0, %s115
      %s117 = sphi 0, %s115
      %s118 = sphi 0, %s117
      %s132 = sphi 0, %s118
      %s136 = sphi 0, %s136
      %s138 = sphi 0, %s136
      %s139 = sphi 0, %s138
      %s153 = sphi 0, %s139
      %s157 = sphi 0, %s157
      %s159 = sphi 0, %s157
      %s160 = sphi 0, %s159
      %s174 = sphi 0, %s160
      %s178 = sphi 0, %s178
      %s180 = sphi 0, %s178
      %s181 = sphi 0, %s180
      %s195 = sphi 0, %s181
      %s199 = sphi 0, %s199
      %s201 = sphi 0, %s199
      %s202 = sphi 0, %s201
      %s216 = sphi 0, %s202
      %s222 = sphi 0, %s224
      %s225 = sphi 0, %s222
      %s226 = sphi 0, %s225
      %s242 = sphi 0, %s226
    $region4: #{moe_forward_pallas.1} parent=1 // loop_header_branch
      %21 = sbr.rel (%p19) target = $region8
    $region5: #{moe_forward_pallas.1} parent=1 // loop_body
      %s23 = ssub.s32 %s18, 1
      %s24 = ssub.s32 %s18, 2
      %s25 = sadd.s32 %s18, 1
      %s26 = ssub.s32 %s18, %s25
      %p27 = scmp.eq.s32.totalorder %s26, 0
      %s29 = sadd.s32 %s28, 1
      %s30 = scalar_select %p27, %s28, %s29
      %p33 = pneg %p27
      %p34 = scmp.eq.s32.totalorder %s18, 1
      %p35 = por %p33, %p34
      %p36 = scmp.ne.s32.totalorder %s28, %s31
      %p37 = scmp.eq.s32.totalorder %s18, 0
      %p38 = por %p36, %p37
      %p39 = scmp.ne.s32.totalorder %s28, %s31
      %p40 = scmp.eq.s32.totalorder %s23, 1
      %p41 = por %p39, %p40
      %p42 = scmp.ne.s32.totalorder %s31, %s32
      %p43 = scmp.eq.s32.totalorder %s23, 0
      %p44 = por %p42, %p43
      %p45 = scmp.ne.s32.totalorder %s31, %s32
      %p46 = scmp.eq.s32.totalorder %s24, 1
      %p47 = por %p45, %p46
      %p49 = scmp.ne.s32.totalorder %s32, %s48
      %p50 = scmp.eq.s32.totalorder %s24, 0
      %p51 = por %p49, %p50
      %s53 = sadd.s32 %s52, 1
      %p56 = scmp.eq.s32.totalorder %s18, 1
      %p57 = scmp.ne.s32.totalorder %s52, %s54
      %p58 = scmp.eq.s32.totalorder %s18, 0
      %p59 = por %p57, %p58
      %p60 = scmp.ne.s32.totalorder %s52, %s54
      %p61 = scmp.eq.s32.totalorder %s23, 1
      %p62 = por %p60, %p61
      %p63 = scmp.ne.s32.totalorder %s54, %s55
      %p64 = scmp.eq.s32.totalorder %s23, 0
      %p65 = por %p63, %p64
      %p66 = scmp.ne.s32.totalorder %s54, %s55
      %p67 = scmp.eq.s32.totalorder %s24, 1
      %p68 = por %p66, %p67
      %p70 = scmp.ne.s32.totalorder %s55, %s69
      %p71 = scmp.eq.s32.totalorder %s24, 0
      %p72 = por %p70, %p71
      %s74 = sadd.s32 %s73, 1
      %p77 = scmp.eq.s32.totalorder %s18, 1
      %p78 = scmp.ne.s32.totalorder %s73, %s75
      %p79 = scmp.eq.s32.totalorder %s18, 0
      %p80 = por %p78, %p79
      %p81 = scmp.ne.s32.totalorder %s73, %s75
      %p82 = scmp.eq.s32.totalorder %s23, 1
      %p83 = por %p81, %p82
      %p84 = scmp.ne.s32.totalorder %s75, %s76
      %p85 = scmp.eq.s32.totalorder %s23, 0
      %p86 = por %p84, %p85
      %p87 = scmp.ne.s32.totalorder %s75, %s76
      %p88 = scmp.eq.s32.totalorder %s24, 1
      %p89 = por %p87, %p88
      %p91 = scmp.ne.s32.totalorder %s76, %s90
      %p92 = scmp.eq.s32.totalorder %s24, 0
      %p93 = por %p91, %p92
      %s95 = sadd.s32 %s94, 1
      %p98 = scmp.eq.s32.totalorder %s18, 1
      %p99 = scmp.ne.s32.totalorder %s94, %s96
      %p100 = scmp.eq.s32.totalorder %s18, 0
      %p101 = por %p99, %p100
      %p102 = scmp.ne.s32.totalorder %s94, %s96
      %p103 = scmp.eq.s32.totalorder %s23, 1
      %p104 = por %p102, %p103
      %p105 = scmp.ne.s32.totalorder %s96, %s97
      %p106 = scmp.eq.s32.totalorder %s23, 0
      %p107 = por %p105, %p106
      %p108 = scmp.ne.s32.totalorder %s96, %s97
      %p109 = scmp.eq.s32.totalorder %s24, 1
      %p110 = por %p108, %p109
      %p112 = scmp.ne.s32.totalorder %s97, %s111
      %p113 = scmp.eq.s32.totalorder %s24, 0
      %p114 = por %p112, %p113
      %s116 = sadd.s32 %s115, 1
      %p119 = scmp.eq.s32.totalorder %s18, 1
      %p120 = scmp.ne.s32.totalorder %s115, %s117
      %p121 = scmp.eq.s32.totalorder %s18, 0
      %p122 = por %p120, %p121
      %p123 = scmp.ne.s32.totalorder %s115, %s117
      %p124 = scmp.eq.s32.totalorder %s23, 1
      %p125 = por %p123, %p124
      %p126 = scmp.ne.s32.totalorder %s117, %s118
      %p127 = scmp.eq.s32.totalorder %s23, 0
      %p128 = por %p126, %p127
      %p129 = scmp.ne.s32.totalorder %s117, %s118
      %p130 = scmp.eq.s32.totalorder %s24, 1
      %p131 = por %p129, %p130
      %p133 = scmp.ne.s32.totalorder %s118, %s132
      %p134 = scmp.eq.s32.totalorder %s24, 0
      %p135 = por %p133, %p134
      %s137 = sadd.s32 %s136, 1
      %p140 = scmp.eq.s32.totalorder %s18, 1
      %p141 = scmp.ne.s32.totalorder %s136, %s138
      %p142 = scmp.eq.s32.totalorder %s18, 0
      %p143 = por %p141, %p142
      %p144 = scmp.ne.s32.totalorder %s136, %s138
      %p145 = scmp.eq.s32.totalorder %s23, 1
      %p146 = por %p144, %p145
      %p147 = scmp.ne.s32.totalorder %s138, %s139
      %p148 = scmp.eq.s32.totalorder %s23, 0
      %p149 = por %p147, %p148
      %p150 = scmp.ne.s32.totalorder %s138, %s139
      %p151 = scmp.eq.s32.totalorder %s24, 1
      %p152 = por %p150, %p151
      %p154 = scmp.ne.s32.totalorder %s139, %s153
      %p155 = scmp.eq.s32.totalorder %s24, 0
      %p156 = por %p154, %p155
      %s158 = sadd.s32 %s157, 1
      %p161 = scmp.eq.s32.totalorder %s18, 1
      %p162 = scmp.ne.s32.totalorder %s157, %s159
      %p163 = scmp.eq.s32.totalorder %s18, 0
      %p164 = por %p162, %p163
      %p165 = scmp.ne.s32.totalorder %s157, %s159
      %p166 = scmp.eq.s32.totalorder %s23, 1
      %p167 = por %p165, %p166
      %p168 = scmp.ne.s32.totalorder %s159, %s160
      %p169 = scmp.eq.s32.totalorder %s23, 0
      %p170 = por %p168, %p169
      %p171 = scmp.ne.s32.totalorder %s159, %s160
      %p172 = scmp.eq.s32.totalorder %s24, 1
      %p173 = por %p171, %p172
      %p175 = scmp.ne.s32.totalorder %s160, %s174
      %p176 = scmp.eq.s32.totalorder %s24, 0
      %p177 = por %p175, %p176
      %s179 = sadd.s32 %s178, 1
      %p182 = scmp.eq.s32.totalorder %s18, 1
      %p183 = scmp.ne.s32.totalorder %s178, %s180
      %p184 = scmp.eq.s32.totalorder %s18, 0
      %p185 = por %p183, %p184
      %p186 = scmp.ne.s32.totalorder %s178, %s180
      %p187 = scmp.eq.s32.totalorder %s23, 1
      %p188 = por %p186, %p187
      %p189 = scmp.ne.s32.totalorder %s180, %s181
      %p190 = scmp.eq.s32.totalorder %s23, 0
      %p191 = por %p189, %p190
      %p192 = scmp.ne.s32.totalorder %s180, %s181
      %p193 = scmp.eq.s32.totalorder %s24, 1
      %p194 = por %p192, %p193
      %p196 = scmp.ne.s32.totalorder %s181, %s195
      %p197 = scmp.eq.s32.totalorder %s24, 0
      %p198 = por %p196, %p197
      %s200 = sadd.s32 %s199, 1
      %p203 = scmp.eq.s32.totalorder %s18, 1
      %p204 = scmp.ne.s32.totalorder %s199, %s201
      %p205 = scmp.eq.s32.totalorder %s18, 0
      %p206 = por %p204, %p205
      %p207 = scmp.ne.s32.totalorder %s199, %s201
      %p208 = scmp.eq.s32.totalorder %s23, 1
      %p209 = por %p207, %p208
      %p210 = scmp.ne.s32.totalorder %s201, %s202
      %p211 = scmp.eq.s32.totalorder %s23, 0
      %p212 = por %p210, %p211
      %p213 = scmp.ne.s32.totalorder %s201, %s202
      %p214 = scmp.eq.s32.totalorder %s24, 1
      %p215 = por %p213, %p214
      %p217 = scmp.ne.s32.totalorder %s202, %s216
      %p218 = scmp.eq.s32.totalorder %s24, 0
      %p219 = por %p217, %p218
      %s220 = ssub.s32 %s18, %s25
      %p221 = scmp.eq.s32.totalorder %s220, 0
      %s223 = sadd.s32 %s222, 1
      %s224 = scalar_select %p221, %s222, %s223
      %p227 = pneg %p221
      %p228 = scmp.eq.s32.totalorder %s18, 1
      %p229 = por %p227, %p228
      %p230 = scmp.ne.s32.totalorder %s222, %s225
      %p231 = scmp.eq.s32.totalorder %s18, 0
      %p232 = por %p230, %p231
      %p233 = scmp.ne.s32.totalorder %s222, %s225
      %p234 = scmp.eq.s32.totalorder %s23, 1
      %p235 = por %p233, %p234
      %p236 = scmp.ne.s32.totalorder %s225, %s226
      %p237 = scmp.eq.s32.totalorder %s23, 0
      %p238 = por %p236, %p237
      %p239 = scmp.ne.s32.totalorder %s225, %s226
      %p240 = scmp.eq.s32.totalorder %s24, 1
      %p241 = por %p239, %p240
      %p243 = scmp.ne.s32.totalorder %s226, %s242
      %p244 = scmp.eq.s32.totalorder %s24, 0
      %p245 = por %p243, %p244
      %p246 = scmp.le.s32.totalorder 1, %s18
      %p247 = scmp.lt.s32.totalorder %s18, 3
      %p248 = pnand %p246, %p247
      %p249 = pneg %p248
      // Predicated region
      $region9: #{moe_forward_pallas.1} parent=5 // pred_check
        _
      $region10: #{moe_forward_pallas.1} parent=5 // pred_check_branch
        %251 = sbr.rel (%p248) target = $region12
      $region11: #{moe_forward_pallas.1} parent=5 // pred_region
        %s252 = ssub.s32 %s18, 1
        // Predicated region
        $region13: #{moe_forward_pallas.1} parent=11 // pred_check
          %p253 = pneg %p65
        $region14: #{moe_forward_pallas.1} parent=11 // pred_check_branch
          %255 = sbr.rel (%p253) target = $region16
        $region15: #{moe_forward_pallas.1} parent=11 // pred_region
          _
        $region16: #{moe_forward_pallas.1} parent=11 // pred_fallthru
          _
        // Predicated region
        $region17: #{moe_forward_pallas.1} parent=11 // pred_check
          %p256 = pneg %p86
        $region18: #{moe_forward_pallas.1} parent=11 // pred_check_branch
          %258 = sbr.rel (%p256) target = $region20
        $region19: #{moe_forward_pallas.1} parent=11 // pred_region
          _
        $region20: #{moe_forward_pallas.1} parent=11 // pred_fallthru
          _
        // Predicated region
        $region21: #{moe_forward_pallas.1} parent=11 // pred_check
          %p259 = pneg %p107
        $region22: #{moe_forward_pallas.1} parent=11 // pred_check_branch
          %261 = sbr.rel (%p259) target = $region24
        $region23: #{moe_forward_pallas.1} parent=11 // pred_region
          _
        $region24: #{moe_forward_pallas.1} parent=11 // pred_fallthru
          _
        // Predicated region
        $region25: #{moe_forward_pallas.1} parent=11 // pred_check
          %p262 = pneg %p128
        $region26: #{moe_forward_pallas.1} parent=11 // pred_check_branch
          %264 = sbr.rel (%p262) target = $region28
        $region27: #{moe_forward_pallas.1} parent=11 // pred_region
          _
        $region28: #{moe_forward_pallas.1} parent=11 // pred_fallthru
          _
        // Predicated region
        $region29: #{moe_forward_pallas.1} parent=11 // pred_check
          %p265 = pneg %p149
        $region30: #{moe_forward_pallas.1} parent=11 // pred_check_branch
          %267 = sbr.rel (%p265) target = $region32
        $region31: #{moe_forward_pallas.1} parent=11 // pred_region
          _
        $region32: #{moe_forward_pallas.1} parent=11 // pred_fallthru
          _
        // Predicated region
        $region33: #{moe_forward_pallas.1} parent=11 // pred_check
          %p268 = pneg %p170
        $region34: #{moe_forward_pallas.1} parent=11 // pred_check_branch
          %270 = sbr.rel (%p268) target = $region36
        $region35: #{moe_forward_pallas.1} parent=11 // pred_region
          _
        $region36: #{moe_forward_pallas.1} parent=11 // pred_fallthru
          _
        // Predicated region
        $region37: #{moe_forward_pallas.1} parent=11 // pred_check
          %p271 = pneg %p191
        $region38: #{moe_forward_pallas.1} parent=11 // pred_check_branch
          %273 = sbr.rel (%p271) target = $region40
        $region39: #{moe_forward_pallas.1} parent=11 // pred_region
          _
        $region40: #{moe_forward_pallas.1} parent=11 // pred_fallthru
          _
        // Predicated region
        $region41: #{moe_forward_pallas.1} parent=11 // pred_check
          %p274 = pneg %p212
        $region42: #{moe_forward_pallas.1} parent=11 // pred_check_branch
          %276 = sbr.rel (%p274) target = $region44
        $region43: #{moe_forward_pallas.1} parent=11 // pred_region
          _
        $region44: #{moe_forward_pallas.1} parent=11 // pred_fallthru
          _
      $region12: #{moe_forward_pallas.1} parent=5 // pred_fallthru
        _
      %p277 = scmp.lt.s32.totalorder %s18, 2
      // Predicated region
      $region45: #{moe_forward_pallas.1} parent=5 // pred_check
        %p278 = pneg %p277
      $region46: #{moe_forward_pallas.1} parent=5 // pred_check_branch
        %280 = sbr.rel (%p278) target = $region48
      $region47: #{moe_forward_pallas.1} parent=5 // pred_region
        // Predicated region
        $region49: #{moe_forward_pallas.1} parent=47 // pred_check
          %p281 = pneg %p38
        $region50: #{moe_forward_pallas.1} parent=47 // pred_check_branch
          %283 = sbr.rel (%p281) target = $region52
        $region51: #{moe_forward_pallas.1} parent=47 // pred_region
          %p284 = scmp.lt.s32.totalorder %s18, 1
          %s285 = scalar_select %p284, %s18, 1
          %s286 = smul.addr %s285, 48
          %s287 = smul.addr %s286, 4
          %s288 = scalar_lea.vmem %s0, %s287
        $region52: #{moe_forward_pallas.1} parent=47 // pred_fallthru
          _
      $region48: #{moe_forward_pallas.1} parent=5 // pred_fallthru
        _
      %p289 = scmp.le.s32.totalorder 1, %s18
      %p290 = scmp.lt.s32.totalorder %s18, 3
      %p291 = pnand %p289, %p290
      %p292 = pneg %p291
      // Predicated region
      $region53: #{moe_forward_pallas.1} parent=5 // pred_check
        _
      $region54: #{moe_forward_pallas.1} parent=5 // pred_check_branch
        %294 = sbr.rel (%p291) target = $region56
      $region55: #{moe_forward_pallas.1} parent=5 // pred_region
        %s295 = ssub.s32 %s18, 1
        %p296 = scmp.lt.s32.totalorder %s23, 1
        %s297 = scalar_select %p296, %s23, 1
        %s298 = smul.addr %s297, 48
        %s299 = smul.addr %s298, 4
        %s300 = scalar_lea.vmem %s0, %s299
        %p301 = pneg %p44
        %p302 = pneg %p41
        %p303 = pneg %p65
        %p304 = pneg %p62
        %p305 = pneg %p86
        %p306 = pneg %p83
        %p307 = pneg %p107
        %p308 = pneg %p104
        %p309 = pneg %p128
        %p310 = pneg %p125
        %p311 = pneg %p149
        %p312 = pneg %p146
        %p313 = pneg %p170
        %p314 = pneg %p167
        %p315 = pneg %p191
        %p316 = pneg %p188
        %p317 = pneg %p212
        %p318 = pneg %p209
        %p319 = pneg %p238
        %p320 = pneg %p235
        %s321 = sand.u32 %s225, 1
        %s322 = scalar_lea.sflag [#allocation12], %s321
        %s323 = sand.u32 %s225, 1
        %s324 = scalar_lea.vmem [#allocation11], %s323
        %p325 = scmp.lt.s32.totalorder %s23, 1
        %s326 = scalar_select %p325, %s23, 1
        %s327 = smul.addr %s326, 48
        %s328 = smul.addr %s327, 4
        %s329 = scalar_lea.vmem %s0, %s328
        %v331 = vld [vmem:[%s2] sm:$0x1]
        loop: start=0, step=1, limit=3
        $region57: #{moe_forward_pallas.1} parent=55 // loop_pre_header
          _
        $region58: #{moe_forward_pallas.1} parent=55 // loop_header
          %s333 = sphi 0, %s337
          %p334 = scmp.ge.s32.totalorder %s333, 3
        $region59: #{moe_forward_pallas.1} parent=55 // loop_header_branch
          %336 = sbr.rel (%p334) target = $region63
        $region60: #{moe_forward_pallas.1} parent=55 // loop_body
          %s338 = smul.u32 %s333, 128
          %s339 = sshra.s32 %s338, 3
          %s340 = sand.u32 %s338, 7
          %s341 = smul.addr %s339, 4
          %s342 = scalar_lea.vmem %s329, %s341
          %v343 = vld [vmem:[%s342] sm:$0xf]
          %v344 = vld [vmem:[%s342 + $0x4] sm:$0xf]
          %v345 = vld [vmem:[%s342 + $0x8] sm:$0xf]
          %v346 = vld [vmem:[%s342 + $0xc] sm:$0xf]
          %v347 = vld [vmem:[%s342 + $0x10] sm:$0xf]
          %v348 = vld [vmem:[%s342 + $0x14] sm:$0xf]
          %v349 = vld [vmem:[%s342 + $0x18] sm:$0xf]
          %v350 = vld [vmem:[%s342 + $0x1c] sm:$0xf]
          %v351 = vld [vmem:[%s342 + $0x20] sm:$0xf]
          %v352 = vld [vmem:[%s342 + $0x24] sm:$0xf]
          %v353 = vld [vmem:[%s342 + $0x28] sm:$0xf]
          %v354 = vld [vmem:[%s342 + $0x2c] sm:$0xf]
          %v355 = vld [vmem:[%s342 + $0x30] sm:$0xf]
          %v356 = vld [vmem:[%s342 + $0x34] sm:$0xf]
          %v357 = vld [vmem:[%s342 + $0x38] sm:$0xf]
          %v358 = vld [vmem:[%s342 + $0x3c] sm:$0xf]
          %v359 = vld [vmem:[%s1] sm:$0xf]
          %v360 = vld [vmem:[%s1 + $0x4] sm:$0xf]
          %v361 = vld [vmem:[%s1 + $0x8] sm:$0xf]
          %v362 = vld [vmem:[%s1 + $0xc] sm:$0x3]
          %v364 = vperm.slane %v331, 0
          %v382 = vunpack.c.l.b16 %v343
          %v383 = vunpack.c.l.b16 %v344
          %v384 = vunpack.c.l.b16 %v345
          %v385 = vunpack.c.l.b16 %v346
          %v386 = vunpack.c.l.b16 %v347
          %v387 = vunpack.c.l.b16 %v348
          %v388 = vunpack.c.l.b16 %v349
          %v389 = vunpack.c.l.b16 %v350
          %v390 = vunpack.c.l.b16 %v351
          %v391 = vunpack.c.l.b16 %v352
          %v392 = vunpack.c.l.b16 %v353
          %v393 = vunpack.c.l.b16 %v354
          %v394 = vunpack.c.l.b16 %v355
          %v395 = vunpack.c.l.b16 %v356
          %v396 = vunpack.c.l.b16 %v357
          %v397 = vunpack.c.l.b16 %v358
          %v398 = vpack.c.b16 %v383, %v382
          %v399 = vpack.c.b16 %v385, %v384
          %v400 = vpack.c.b16 %v387, %v386
          %v401 = vpack.c.b16 %v389, %v388
          %v402 = vpack.c.b16 %v391, %v390
          %v403 = vpack.c.b16 %v393, %v392
          %v404 = vpack.c.b16 %v395, %v394
          %v405 = vpack.c.b16 %v397, %v396
          %v410 = vunpack.c.l.b16 %v359
          %v411 = vunpack.c.l.b16 %v360
          %v412 = vunpack.c.l.b16 %v361
          %v413 = vunpack.c.l.b16 %v362
          %v414 = vpack.c.b16 %v411, %v410
          %v415 = vpack.c.b16 %v413, %v412
          %vm417 = vcmask 220160
          %v419 = vsel %vm417, %v398, 0
          %v422 = vsel %vm417, %v399, 0
          %v425 = vsel %vm417, %v400, 0
          %v428 = vsel %vm417, %v401, 0
          %v431 = vsel %vm417, %v402, 0
          %v434 = vsel %vm417, %v403, 0
          %v437 = vsel %vm417, %v404, 0
          %v440 = vsel %vm417, %v405, 0
          %vm442 = vcmask 1044480
          %vm443 = vcmask 1045504
          %v444 = vsel %vm442, 4294967295, 65535
          %v445 = vsel %vm443, %v444, 0
          %v447 = vand.u32 %v415, %v445
          %449 = vmatpush.bf16.msra.mxu0 0
          %450 = vmatpush.bf16.msra.mxu0 0
          %451 = vmatpush.bf16.msra.mxu0 0
          %452 = vmatpush.bf16.msra.mxu0 0
          %453 = vmatpush.bf16.msra.mxu0 0
          %454 = vmatpush.bf16.msra.mxu0 0
          %455 = vmatpush.bf16.msra.mxu0 %v447
          %456 = vmatpush.bf16.msra.mxu0 %v414
          %457 = vmatmul.bf16.gmra.mxu0 %v419
          %v458 = vpop.f32.mrf.mxu0
          %v459 = vadd.f32 %v364, %v458
          %v460 = vpop.f32.mrf.mxu0
          %v461 = vadd.f32 %v364, %v460
          %462 = vmatmul.bf16.gmra.mxu0 %v422
          %v463 = vpop.f32.mrf.mxu0
          %v464 = vadd.f32 %v364, %v463
          %v465 = vpop.f32.mrf.mxu0
          %v466 = vadd.f32 %v364, %v465
          %467 = vmatmul.bf16.gmra.mxu0 %v425
          %v468 = vpop.f32.mrf.mxu0
          %v469 = vadd.f32 %v364, %v468
          %v470 = vpop.f32.mrf.mxu0
          %v471 = vadd.f32 %v364, %v470
          %472 = vmatmul.bf16.gmra.mxu0 %v428
          %v473 = vpop.f32.mrf.mxu0
          %v474 = vadd.f32 %v364, %v473
          %v475 = vpop.f32.mrf.mxu0
          %v476 = vadd.f32 %v364, %v475
          %477 = vmatmul.bf16.gmra.mxu0 %v431
          %v478 = vpop.f32.mrf.mxu0
          %v479 = vadd.f32 %v364, %v478
          %v480 = vpop.f32.mrf.mxu0
          %v481 = vadd.f32 %v364, %v480
          %482 = vmatmul.bf16.gmra.mxu0 %v434
          %v483 = vpop.f32.mrf.mxu0
          %v484 = vadd.f32 %v364, %v483
          %v485 = vpop.f32.mrf.mxu0
          %v486 = vadd.f32 %v364, %v485
          %487 = vmatmul.bf16.gmra.mxu0 %v437
          %v488 = vpop.f32.mrf.mxu0
          %v489 = vadd.f32 %v364, %v488
          %v490 = vpop.f32.mrf.mxu0
          %v491 = vadd.f32 %v364, %v490
          %492 = vmatmul.bf16.gmra.mxu0 %v440
          %v493 = vpop.f32.mrf.mxu0
          %v494 = vadd.f32 %v364, %v493
          %v495 = vpop.f32.mrf.mxu0
          %v496 = vadd.f32 %v364, %v495
          %497 = vdwg.mxu0
          %v498 = vmax.f32 %v459, 0.0
          %v499 = vmax.f32 %v461, 0.0
          %v500 = vmax.f32 %v464, 0.0
          %v501 = vmax.f32 %v466, 0.0
          %v502 = vmax.f32 %v469, 0.0
          %v503 = vmax.f32 %v471, 0.0
          %v504 = vmax.f32 %v474, 0.0
          %v505 = vmax.f32 %v476, 0.0
          %v506 = vmax.f32 %v479, 0.0
          %v507 = vmax.f32 %v481, 0.0
          %v508 = vmax.f32 %v484, 0.0
          %v509 = vmax.f32 %v486, 0.0
          %v510 = vmax.f32 %v489, 0.0
          %v511 = vmax.f32 %v491, 0.0
          %v512 = vmax.f32 %v494, 0.0
          %v513 = vmax.f32 %v496, 0.0
          %s514 = scalar_lea.vmem [#allocation2], %s338
          %vm515 = vcmask 261120
          %516 = vst.msk [vmem:[%s514] sm:$0xff] %vm515, %v498
          %517 = vst.msk [vmem:[%s514 + $0x8] sm:$0xff] %vm515, %v499
          %518 = vst.msk [vmem:[%s514 + $0x10] sm:$0xff] %vm515, %v500
          %519 = vst.msk [vmem:[%s514 + $0x18] sm:$0xff] %vm515, %v501
          %520 = vst.msk [vmem:[%s514 + $0x20] sm:$0xff] %vm515, %v502
          %521 = vst.msk [vmem:[%s514 + $0x28] sm:$0xff] %vm515, %v503
          %522 = vst.msk [vmem:[%s514 + $0x30] sm:$0xff] %vm515, %v504
          %523 = vst.msk [vmem:[%s514 + $0x38] sm:$0xff] %vm515, %v505
          %524 = vst.msk [vmem:[%s514 + $0x40] sm:$0xff] %vm515, %v506
          %525 = vst.msk [vmem:[%s514 + $0x48] sm:$0xff] %vm515, %v507
          %526 = vst.msk [vmem:[%s514 + $0x50] sm:$0xff] %vm515, %v508
          %527 = vst.msk [vmem:[%s514 + $0x58] sm:$0xff] %vm515, %v509
          %528 = vst.msk [vmem:[%s514 + $0x60] sm:$0xff] %vm515, %v510
          %529 = vst.msk [vmem:[%s514 + $0x68] sm:$0xff] %vm515, %v511
          %530 = vst.msk [vmem:[%s514 + $0x70] sm:$0xff] %vm515, %v512
          %531 = vst.msk [vmem:[%s514 + $0x78] sm:$0xff] %vm515, %v513
        $region61: #{moe_forward_pallas.1} parent=55 // loop_footer
          %s337 = sadd.s32 1, %s333
        $region62: #{moe_forward_pallas.1} parent=55 // loop_footer_branch
          %332 = sbr.rel target = $region58
        $region63: #{moe_forward_pallas.1} parent=55 // loop_exit
          _
        %vm532 = vcmask 261120
        %533 = vst.msk [vmem:[#allocation3] sm:$0xff] %vm532, 0.0
        %534 = vst.msk [vmem:[#allocation3 + $0x8] sm:$0xff] %vm532, 0.0
        %535 = vst.msk [vmem:[#allocation3 + $0x10] sm:$0xff] %vm532, 0.0
        %vm536 = vcmask 256000
        %537 = vst.msk [vmem:[#allocation3 + $0x18] sm:$0x7] %vm536, 0.0
        loop: start=0, step=1, limit=8
        $region64: #{moe_forward_pallas.1} parent=55 // loop_pre_header
          _
        $region65: #{moe_forward_pallas.1} parent=55 // loop_header
          %s539 = sphi 0, %s543
          %p540 = scmp.ge.s32.totalorder %s539, 8
        $region66: #{moe_forward_pallas.1} parent=55 // loop_header_branch
          %542 = sbr.rel (%p540) target = $region70
        $region67: #{moe_forward_pallas.1} parent=55 // loop_body
          %s544 = smul.u32 %s539, 2
          %s545 = sadd.s32 %s544, 1
          %s546 = smul.u32 %s545, 18
          %s547 = scalar_lea.vmem [#allocation2], %s546
          %v548 = vld [vmem:[%s547] sm:$0xff]
          %v549 = vld [vmem:[%s547 + $0x8] sm:$0xff]
          %v550 = vld [vmem:[%s547 + $0x10] sm:$0x3]
          %s551 = sadd.s32 %s546, 18
          %s552 = scalar_lea.vmem [#allocation2], %s551
          %v553 = vld [vmem:[%s552] sm:$0xff]
          %v554 = vld [vmem:[%s552 + $0x8] sm:$0xff]
          %v555 = vld [vmem:[%s552 + $0x10] sm:$0x3]
          %v556 = vmax.f32 %v548, %v553
          %v557 = vmax.f32 %v549, %v554
          %v558 = vmax.f32 %v550, %v555
          %559 = vst.msk [vmem:[#allocation10] sm:$0xff] %vm532, %v556
          %560 = vst.msk [vmem:[#allocation10 + $0x8] sm:$0xff] %vm532, %v557
          %vm561 = vcmask 254976
          %562 = vst.msk [vmem:[#allocation10 + $0x10] sm:$0x3] %vm561, %v558
          %s563 = scalar_lea.vmem [#allocation10], 1
          %v564 = vld [vmem:[%s563] ss:$2 sm:$0xff]
          %s565 = scalar_lea.vmem [#allocation10], 2
          %v566 = vld [vmem:[%s565] ss:$2 sm:$0xff]
          %s567 = sadd.s32 %s539, 1
          %s568 = smul.u32 %s567, 10
          %s569 = sadd.s32 %s568, 17
          %v570 = vmax.f32 %v564, %v566
          %s571 = scalar_lea.vmem [#allocation3], %s569
          %572 = vst.msk [vmem:[%s571] sm:$0xff] %vm532, %v570
          %s573 = sadd.s32 %s568, 25
          %s574 = scalar_lea.vmem [#allocation3], %s573
          %575 = vst.msk [vmem:[%s574] sm:$0x3] %vm561, 0.0
        $region68: #{moe_forward_pallas.1} parent=55 // loop_footer
          %s543 = sadd.s32 1, %s539
        $region69: #{moe_forward_pallas.1} parent=55 // loop_footer_branch
          %538 = sbr.rel target = $region65
        $region70: #{moe_forward_pallas.1} parent=55 // loop_exit
          _
        %576 = vst.msk [vmem:[#allocation3 + $0x6b] sm:$0xff] %vm532, 0.0
        %577 = vst.msk [vmem:[#allocation3 + $0x73] sm:$0xff] %vm532, 0.0
        %578 = vst.msk [vmem:[#allocation3 + $0x7b] sm:$0xff] %vm532, 0.0
        %vm579 = vcmask 258048
        %580 = vst.msk [vmem:[#allocation3 + $0x83] sm:$0x1f] %vm579, 0.0
        %v581 = vld [vmem:[%s4] sm:$0x1]
        %v582 = vld [vmem:[#allocation3 + $0x5] sm:$0xff]
        %v583 = vld [vmem:[#allocation3 + $0xd] sm:$0xff]
        %v584 = vld [vmem:[#allocation3 + $0x15] sm:$0xff]
        %v585 = vld [vmem:[#allocation3 + $0x1d] sm:$0xff]
        %v586 = vld [vmem:[#allocation3 + $0x25] sm:$0xff]
        %v587 = vld [vmem:[#allocation3 + $0x2d] sm:$0xff]
        %v588 = vld [vmem:[#allocation3 + $0x35] sm:$0xff]
        %v589 = vld [vmem:[#allocation3 + $0x3d] sm:$0xff]
        %v590 = vld [vmem:[#allocation3 + $0x45] sm:$0xff]
        %v591 = vld [vmem:[#allocation3 + $0x4d] sm:$0xff]
        %v592 = vld [vmem:[#allocation3 + $0x55] sm:$0xff]
        %v593 = vld [vmem:[#allocation3 + $0x5d] sm:$0xff]
        %v594 = vld [vmem:[#allocation3 + $0x65] sm:$0xff]
        %595 = vst.msk [vmem:[#allocation4] sm:$0xff] %vm532, %v582
        %596 = vst.msk [vmem:[#allocation4 + $0x18] sm:$0xff] %vm532, %v583
        %597 = vst.msk [vmem:[#allocation4 + $0x30] sm:$0xff] %vm532, %v584
        %598 = vst.msk [vmem:[#allocation4 + $0x48] sm:$0xff] %vm532, %v585
        %599 = vst.msk [vmem:[#allocation4 + $0x60] sm:$0xff] %vm532, %v586
        %600 = vst.msk [vmem:[#allocation4 + $0x78] sm:$0xff] %vm532, %v587
        %601 = vst.msk [vmem:[#allocation4 + $0x90] sm:$0xff] %vm532, %v588
        %602 = vst.msk [vmem:[#allocation4 + $0xa8] sm:$0xff] %vm532, %v589
        %603 = vst.msk [vmem:[#allocation4 + $0xc0] sm:$0xff] %vm532, %v590
        %604 = vst.msk [vmem:[#allocation4 + $0xd8] sm:$0xff] %vm532, %v591
        %605 = vst.msk [vmem:[#allocation4 + $0xf0] sm:$0xff] %vm532, %v592
        %606 = vst.msk [vmem:[#allocation4 + $0x108] sm:$0xff] %vm532, %v593
        %607 = vst.msk [vmem:[#allocation4 + $0x120] sm:$0xff] %vm532, %v594
        %v608 = vld [vmem:[#allocation3 + $0x6] sm:$0xff]
        %v609 = vld [vmem:[#allocation3 + $0xe] sm:$0xff]
        %v610 = vld [vmem:[#allocation3 + $0x16] sm:$0xff]
        %v611 = vld [vmem:[#allocation3 + $0x1e] sm:$0xff]
        %v612 = vld [vmem:[#allocation3 + $0x26] sm:$0xff]
        %v613 = vld [vmem:[#allocation3 + $0x2e] sm:$0xff]
        %v614 = vld [vmem:[#allocation3 + $0x36] sm:$0xff]
        %v615 = vld [vmem:[#allocation3 + $0x3e] sm:$0xff]
        %v616 = vld [vmem:[#allocation3 + $0x46] sm:$0xff]
        %v617 = vld [vmem:[#allocation3 + $0x4e] sm:$0xff]
        %v618 = vld [vmem:[#allocation3 + $0x56] sm:$0xff]
        %v619 = vld [vmem:[#allocation3 + $0x5e] sm:$0xff]
        %v620 = vld [vmem:[#allocation3 + $0x66] sm:$0xff]
        %634 = vrot.lane.b32.xlu0 %v608, 32
        %v635 = vpop.permute.xlu0 %634
        %636 = vrot.lane.b32.xlu0 %v609, 32
        %v637 = vpop.permute.xlu0 %636
        %638 = vrot.lane.b32.xlu0 %v610, 32
        %v639 = vpop.permute.xlu0 %638
        %640 = vrot.lane.b32.xlu0 %v611, 32
        %v641 = vpop.permute.xlu0 %640
        %642 = vrot.lane.b32.xlu0 %v612, 32
        %v643 = vpop.permute.xlu0 %642
        %644 = vrot.lane.b32.xlu0 %v613, 32
        %v645 = vpop.permute.xlu0 %644
        %646 = vrot.lane.b32.xlu0 %v614, 32
        %v647 = vpop.permute.xlu0 %646
        %648 = vrot.lane.b32.xlu0 %v615, 32
        %v649 = vpop.permute.xlu0 %648
        %650 = vrot.lane.b32.xlu0 %v616, 32
        %v651 = vpop.permute.xlu0 %650
        %652 = vrot.lane.b32.xlu0 %v617, 32
        %v653 = vpop.permute.xlu0 %652
        %654 = vrot.lane.b32.xlu0 %v618, 32
        %v655 = vpop.permute.xlu0 %654
        %656 = vrot.lane.b32.xlu0 %v619, 32
        %v657 = vpop.permute.xlu0 %656
        %658 = vrot.lane.b32.xlu0 %v620, 32
        %v659 = vpop.permute.xlu0 %658
        %vm673 = vcmask 523520
        %674 = vst.msk [vmem:[#allocation4] sm:$0xff] %vm673, %v635
        %675 = vst.msk [vmem:[#allocation4 + $0x18] sm:$0xff] %vm673, %v637
        %676 = vst.msk [vmem:[#allocation4 + $0x30] sm:$0xff] %vm673, %v639
        %677 = vst.msk [vmem:[#allocation4 + $0x48] sm:$0xff] %vm673, %v641
        %678 = vst.msk [vmem:[#allocation4 + $0x60] sm:$0xff] %vm673, %v643
        %679 = vst.msk [vmem:[#allocation4 + $0x78] sm:$0xff] %vm673, %v645
        %680 = vst.msk [vmem:[#allocation4 + $0x90] sm:$0xff] %vm673, %v647
        %681 = vst.msk [vmem:[#allocation4 + $0xa8] sm:$0xff] %vm673, %v649
        %682 = vst.msk [vmem:[#allocation4 + $0xc0] sm:$0xff] %vm673, %v651
        %683 = vst.msk [vmem:[#allocation4 + $0xd8] sm:$0xff] %vm673, %v653
        %684 = vst.msk [vmem:[#allocation4 + $0xf0] sm:$0xff] %vm673, %v655
        %685 = vst.msk [vmem:[#allocation4 + $0x108] sm:$0xff] %vm673, %v657
        %686 = vst.msk [vmem:[#allocation4 + $0x120] sm:$0xff] %vm673, %v659
        %v687 = vld [vmem:[#allocation3 + $0x7] sm:$0xff]
        %v688 = vld [vmem:[#allocation3 + $0xf] sm:$0xff]
        %v689 = vld [vmem:[#allocation3 + $0x17] sm:$0xff]
        %v690 = vld [vmem:[#allocation3 + $0x1f] sm:$0xff]
        %v691 = vld [vmem:[#allocation3 + $0x27] sm:$0xff]
        %v692 = vld [vmem:[#allocation3 + $0x2f] sm:$0xff]
        %v693 = vld [vmem:[#allocation3 + $0x37] sm:$0xff]
        %v694 = vld [vmem:[#allocation3 + $0x3f] sm:$0xff]
        %v695 = vld [vmem:[#allocation3 + $0x47] sm:$0xff]
        %v696 = vld [vmem:[#allocation3 + $0x4f] sm:$0xff]
        %v697 = vld [vmem:[#allocation3 + $0x57] sm:$0xff]
        %v698 = vld [vmem:[#allocation3 + $0x5f] sm:$0xff]
        %v699 = vld [vmem:[#allocation3 + $0x67] sm:$0xff]
        %713 = vrot.lane.b32.xlu0 %v687, 64
        %v714 = vpop.permute.xlu0 %713
        %715 = vrot.lane.b32.xlu0 %v688, 64
        %v716 = vpop.permute.xlu0 %715
        %717 = vrot.lane.b32.xlu0 %v689, 64
        %v718 = vpop.permute.xlu0 %717
        %719 = vrot.lane.b32.xlu0 %v690, 64
        %v720 = vpop.permute.xlu0 %719
        %721 = vrot.lane.b32.xlu0 %v691, 64
        %v722 = vpop.permute.xlu0 %721
        %723 = vrot.lane.b32.xlu0 %v692, 64
        %v724 = vpop.permute.xlu0 %723
        %725 = vrot.lane.b32.xlu0 %v693, 64
        %v726 = vpop.permute.xlu0 %725
        %727 = vrot.lane.b32.xlu0 %v694, 64
        %v728 = vpop.permute.xlu0 %727
        %729 = vrot.lane.b32.xlu0 %v695, 64
        %v730 = vpop.permute.xlu0 %729
        %731 = vrot.lane.b32.xlu0 %v696, 64
        %v732 = vpop.permute.xlu0 %731
        %733 = vrot.lane.b32.xlu0 %v697, 64
        %v734 = vpop.permute.xlu0 %733
        %735 = vrot.lane.b32.xlu0 %v698, 64
        %v736 = vpop.permute.xlu0 %735
        %737 = vrot.lane.b32.xlu0 %v699, 64
        %v738 = vpop.permute.xlu0 %737
        %vm752 = vcmask 785920
        %753 = vst.msk [vmem:[#allocation4] sm:$0xff] %vm752, %v714
        %754 = vst.msk [vmem:[#allocation4 + $0x18] sm:$0xff] %vm752, %v716
        %755 = vst.msk [vmem:[#allocation4 + $0x30] sm:$0xff] %vm752, %v718
        %756 = vst.msk [vmem:[#allocation4 + $0x48] sm:$0xff] %vm752, %v720
        %757 = vst.msk [vmem:[#allocation4 + $0x60] sm:$0xff] %vm752, %v722
        %758 = vst.msk [vmem:[#allocation4 + $0x78] sm:$0xff] %vm752, %v724
        %759 = vst.msk [vmem:[#allocation4 + $0x90] sm:$0xff] %vm752, %v726
        %760 = vst.msk [vmem:[#allocation4 + $0xa8] sm:$0xff] %vm752, %v728
        %761 = vst.msk [vmem:[#allocation4 + $0xc0] sm:$0xff] %vm752, %v730
        %762 = vst.msk [vmem:[#allocation4 + $0xd8] sm:$0xff] %vm752, %v732
        %763 = vst.msk [vmem:[#allocation4 + $0xf0] sm:$0xff] %vm752, %v734
        %764 = vst.msk [vmem:[#allocation4 + $0x108] sm:$0xff] %vm752, %v736
        %765 = vst.msk [vmem:[#allocation4 + $0x120] sm:$0xff] %vm752, %v738
        %v766 = vld [vmem:[#allocation3 + $0xf] sm:$0xff]
        %v767 = vld [vmem:[#allocation3 + $0x17] sm:$0xff]
        %v768 = vld [vmem:[#allocation3 + $0x1f] sm:$0xff]
        %v769 = vld [vmem:[#allocation3 + $0x27] sm:$0xff]
        %v770 = vld [vmem:[#allocation3 + $0x2f] sm:$0xff]
        %v771 = vld [vmem:[#allocation3 + $0x37] sm:$0xff]
        %v772 = vld [vmem:[#allocation3 + $0x3f] sm:$0xff]
        %v773 = vld [vmem:[#allocation3 + $0x47] sm:$0xff]
        %v774 = vld [vmem:[#allocation3 + $0x4f] sm:$0xff]
        %v775 = vld [vmem:[#allocation3 + $0x57] sm:$0xff]
        %v776 = vld [vmem:[#allocation3 + $0x5f] sm:$0xff]
        %v777 = vld [vmem:[#allocation3 + $0x67] sm:$0xff]
        %v778 = vld [vmem:[#allocation3 + $0x6f] sm:$0xff]
        %792 = vrot.lane.b32.xlu0 %v766, 96
        %v793 = vpop.permute.xlu0 %792
        %794 = vrot.lane.b32.xlu0 %v767, 96
        %v795 = vpop.permute.xlu0 %794
        %796 = vrot.lane.b32.xlu0 %v768, 96
        %v797 = vpop.permute.xlu0 %796
        %798 = vrot.lane.b32.xlu0 %v769, 96
        %v799 = vpop.permute.xlu0 %798
        %800 = vrot.lane.b32.xlu0 %v770, 96
        %v801 = vpop.permute.xlu0 %800
        %802 = vrot.lane.b32.xlu0 %v771, 96
        %v803 = vpop.permute.xlu0 %802
        %804 = vrot.lane.b32.xlu0 %v772, 96
        %v805 = vpop.permute.xlu0 %804
        %806 = vrot.lane.b32.xlu0 %v773, 96
        %v807 = vpop.permute.xlu0 %806
        %808 = vrot.lane.b32.xlu0 %v774, 96
        %v809 = vpop.permute.xlu0 %808
        %810 = vrot.lane.b32.xlu0 %v775, 96
        %v811 = vpop.permute.xlu0 %810
        %812 = vrot.lane.b32.xlu0 %v776, 96
        %v813 = vpop.permute.xlu0 %812
        %814 = vrot.lane.b32.xlu0 %v777, 96
        %v815 = vpop.permute.xlu0 %814
        %816 = vrot.lane.b32.xlu0 %v778, 96
        %v817 = vpop.permute.xlu0 %816
        %vm831 = vcmask 1048320
        %832 = vst.msk [vmem:[#allocation4] sm:$0xff] %vm831, %v793
        %833 = vst.msk [vmem:[#allocation4 + $0x18] sm:$0xff] %vm831, %v795
        %834 = vst.msk [vmem:[#allocation4 + $0x30] sm:$0xff] %vm831, %v797
        %835 = vst.msk [vmem:[#allocation4 + $0x48] sm:$0xff] %vm831, %v799
        %836 = vst.msk [vmem:[#allocation4 + $0x60] sm:$0xff] %vm831, %v801
        %837 = vst.msk [vmem:[#allocation4 + $0x78] sm:$0xff] %vm831, %v803
        %838 = vst.msk [vmem:[#allocation4 + $0x90] sm:$0xff] %vm831, %v805
        %839 = vst.msk [vmem:[#allocation4 + $0xa8] sm:$0xff] %vm831, %v807
        %840 = vst.msk [vmem:[#allocation4 + $0xc0] sm:$0xff] %vm831, %v809
        %841 = vst.msk [vmem:[#allocation4 + $0xd8] sm:$0xff] %vm831, %v811
        %842 = vst.msk [vmem:[#allocation4 + $0xf0] sm:$0xff] %vm831, %v813
        %843 = vst.msk [vmem:[#allocation4 + $0x108] sm:$0xff] %vm831, %v815
        %844 = vst.msk [vmem:[#allocation4 + $0x120] sm:$0xff] %vm831, %v817
        %v845 = vld [vmem:[#allocation3 + $0x10] sm:$0xff]
        %v846 = vld [vmem:[#allocation3 + $0x18] sm:$0xff]
        %v847 = vld [vmem:[#allocation3 + $0x20] sm:$0xff]
        %v848 = vld [vmem:[#allocation3 + $0x28] sm:$0xff]
        %v849 = vld [vmem:[#allocation3 + $0x30] sm:$0xff]
        %v850 = vld [vmem:[#allocation3 + $0x38] sm:$0xff]
        %v851 = vld [vmem:[#allocation3 + $0x40] sm:$0xff]
        %v852 = vld [vmem:[#allocation3 + $0x48] sm:$0xff]
        %v853 = vld [vmem:[#allocation3 + $0x50] sm:$0xff]
        %v854 = vld [vmem:[#allocation3 + $0x58] sm:$0xff]
        %v855 = vld [vmem:[#allocation3 + $0x60] sm:$0xff]
        %v856 = vld [vmem:[#allocation3 + $0x68] sm:$0xff]
        %v857 = vld [vmem:[#allocation3 + $0x70] sm:$0xff]
        %858 = vst.msk [vmem:[#allocation4 + $0x8] sm:$0xff] %vm532, %v845
        %859 = vst.msk [vmem:[#allocation4 + $0x20] sm:$0xff] %vm532, %v846
        %860 = vst.msk [vmem:[#allocation4 + $0x38] sm:$0xff] %vm532, %v847
        %861 = vst.msk [vmem:[#allocation4 + $0x50] sm:$0xff] %vm532, %v848
        %862 = vst.msk [vmem:[#allocation4 + $0x68] sm:$0xff] %vm532, %v849
        %863 = vst.msk [vmem:[#allocation4 + $0x80] sm:$0xff] %vm532, %v850
        %864 = vst.msk [vmem:[#allocation4 + $0x98] sm:$0xff] %vm532, %v851
        %865 = vst.msk [vmem:[#allocation4 + $0xb0] sm:$0xff] %vm532, %v852
        %866 = vst.msk [vmem:[#allocation4 + $0xc8] sm:$0xff] %vm532, %v853
        %867 = vst.msk [vmem:[#allocation4 + $0xe0] sm:$0xff] %vm532, %v854
        %868 = vst.msk [vmem:[#allocation4 + $0xf8] sm:$0xff] %vm532, %v855
        %869 = vst.msk [vmem:[#allocation4 + $0x110] sm:$0xff] %vm532, %v856
        %870 = vst.msk [vmem:[#allocation4 + $0x128] sm:$0xff] %vm532, %v857
        %v871 = vld [vmem:[#allocation3 + $0x11] sm:$0xff]
        %v872 = vld [vmem:[#allocation3 + $0x19] sm:$0xff]
        %v873 = vld [vmem:[#allocation3 + $0x21] sm:$0xff]
        %v874 = vld [vmem:[#allocation3 + $0x29] sm:$0xff]
        %v875 = vld [vmem:[#allocation3 + $0x31] sm:$0xff]
        %v876 = vld [vmem:[#allocation3 + $0x39] sm:$0xff]
        %v877 = vld [vmem:[#allocation3 + $0x41] sm:$0xff]
        %v878 = vld [vmem:[#allocation3 + $0x49] sm:$0xff]
        %v879 = vld [vmem:[#allocation3 + $0x51] sm:$0xff]
        %v880 = vld [vmem:[#allocation3 + $0x59] sm:$0xff]
        %v881 = vld [vmem:[#allocation3 + $0x61] sm:$0xff]
        %v882 = vld [vmem:[#allocation3 + $0x69] sm:$0xff]
        %v883 = vld [vmem:[#allocation3 + $0x71] sm:$0xff]
        %897 = vrot.lane.b32.xlu0 %v871, 32
        %v898 = vpop.permute.xlu0 %897
        %899 = vrot.lane.b32.xlu0 %v872, 32
        %v900 = vpop.permute.xlu0 %899
        %901 = vrot.lane.b32.xlu0 %v873, 32
        %v902 = vpop.permute.xlu0 %901
        %903 = vrot.lane.b32.xlu0 %v874, 32
        %v904 = vpop.permute.xlu0 %903
        %905 = vrot.lane.b32.xlu0 %v875, 32
        %v906 = vpop.permute.xlu0 %905
        %907 = vrot.lane.b32.xlu0 %v876, 32
        %v908 = vpop.permute.xlu0 %907
        %909 = vrot.lane.b32.xlu0 %v877, 32
        %v910 = vpop.permute.xlu0 %909
        %911 = vrot.lane.b32.xlu0 %v878, 32
        %v912 = vpop.permute.xlu0 %911
        %913 = vrot.lane.b32.xlu0 %v879, 32
        %v914 = vpop.permute.xlu0 %913
        %915 = vrot.lane.b32.xlu0 %v880, 32
        %v916 = vpop.permute.xlu0 %915
        %917 = vrot.lane.b32.xlu0 %v881, 32
        %v918 = vpop.permute.xlu0 %917
        %919 = vrot.lane.b32.xlu0 %v882, 32
        %v920 = vpop.permute.xlu0 %919
        %921 = vrot.lane.b32.xlu0 %v883, 32
        %v922 = vpop.permute.xlu0 %921
        %936 = vst.msk [vmem:[#allocation4 + $0x8] sm:$0xff] %vm673, %v898
        %937 = vst.msk [vmem:[#allocation4 + $0x20] sm:$0xff] %vm673, %v900
        %938 = vst.msk [vmem:[#allocation4 + $0x38] sm:$0xff] %vm673, %v902
        %939 = vst.msk [vmem:[#allocation4 + $0x50] sm:$0xff] %vm673, %v904
        %940 = vst.msk [vmem:[#allocation4 + $0x68] sm:$0xff] %vm673, %v906
        %941 = vst.msk [vmem:[#allocation4 + $0x80] sm:$0xff] %vm673, %v908
        %942 = vst.msk [vmem:[#allocation4 + $0x98] sm:$0xff] %vm673, %v910
        %943 = vst.msk [vmem:[#allocation4 + $0xb0] sm:$0xff] %vm673, %v912
        %944 = vst.msk [vmem:[#allocation4 + $0xc8] sm:$0xff] %vm673, %v914
        %945 = vst.msk [vmem:[#allocation4 + $0xe0] sm:$0xff] %vm673, %v916
        %946 = vst.msk [vmem:[#allocation4 + $0xf8] sm:$0xff] %vm673, %v918
        %947 = vst.msk [vmem:[#allocation4 + $0x110] sm:$0xff] %vm673, %v920
        %948 = vst.msk [vmem:[#allocation4 + $0x128] sm:$0xff] %vm673, %v922
        %v949 = vld [vmem:[#allocation3 + $0x19] sm:$0xff]
        %v950 = vld [vmem:[#allocation3 + $0x21] sm:$0xff]
        %v951 = vld [vmem:[#allocation3 + $0x29] sm:$0xff]
        %v952 = vld [vmem:[#allocation3 + $0x31] sm:$0xff]
        %v953 = vld [vmem:[#allocation3 + $0x39] sm:$0xff]
        %v954 = vld [vmem:[#allocation3 + $0x41] sm:$0xff]
        %v955 = vld [vmem:[#allocation3 + $0x49] sm:$0xff]
        %v956 = vld [vmem:[#allocation3 + $0x51] sm:$0xff]
        %v957 = vld [vmem:[#allocation3 + $0x59] sm:$0xff]
        %v958 = vld [vmem:[#allocation3 + $0x61] sm:$0xff]
        %v959 = vld [vmem:[#allocation3 + $0x69] sm:$0xff]
        %v960 = vld [vmem:[#allocation3 + $0x71] sm:$0xff]
        %v961 = vld [vmem:[#allocation3 + $0x79] sm:$0xff]
        %975 = vrot.lane.b32.xlu0 %v949, 64
        %v976 = vpop.permute.xlu0 %975
        %977 = vrot.lane.b32.xlu0 %v950, 64
        %v978 = vpop.permute.xlu0 %977
        %979 = vrot.lane.b32.xlu0 %v951, 64
        %v980 = vpop.permute.xlu0 %979
        %981 = vrot.lane.b32.xlu0 %v952, 64
        %v982 = vpop.permute.xlu0 %981
        %983 = vrot.lane.b32.xlu0 %v953, 64
        %v984 = vpop.permute.xlu0 %983
        %985 = vrot.lane.b32.xlu0 %v954, 64
        %v986 = vpop.permute.xlu0 %985
        %987 = vrot.lane.b32.xlu0 %v955, 64
        %v988 = vpop.permute.xlu0 %987
        %989 = vrot.lane.b32.xlu0 %v956, 64
        %v990 = vpop.permute.xlu0 %989
        %991 = vrot.lane.b32.xlu0 %v957, 64
        %v992 = vpop.permute.xlu0 %991
        %993 = vrot.lane.b32.xlu0 %v958, 64
        %v994 = vpop.permute.xlu0 %993
        %995 = vrot.lane.b32.xlu0 %v959, 64
        %v996 = vpop.permute.xlu0 %995
        %997 = vrot.lane.b32.xlu0 %v960, 64
        %v998 = vpop.permute.xlu0 %997
        %999 = vrot.lane.b32.xlu0 %v961, 64
        %v1000 = vpop.permute.xlu0 %999
        %1014 = vst.msk [vmem:[#allocation4 + $0x8] sm:$0xff] %vm752, %v976
        %1015 = vst.msk [vmem:[#allocation4 + $0x20] sm:$0xff] %vm752, %v978
        %1016 = vst.msk [vmem:[#allocation4 + $0x38] sm:$0xff] %vm752, %v980
        %1017 = vst.msk [vmem:[#allocation4 + $0x50] sm:$0xff] %vm752, %v982
        %1018 = vst.msk [vmem:[#allocation4 + $0x68] sm:$0xff] %vm752, %v984
        %1019 = vst.msk [vmem:[#allocation4 + $0x80] sm:$0xff] %vm752, %v986
        %1020 = vst.msk [vmem:[#allocation4 + $0x98] sm:$0xff] %vm752, %v988
        %1021 = vst.msk [vmem:[#allocation4 + $0xb0] sm:$0xff] %vm752, %v990
        %1022 = vst.msk [vmem:[#allocation4 + $0xc8] sm:$0xff] %vm752, %v992
        %1023 = vst.msk [vmem:[#allocation4 + $0xe0] sm:$0xff] %vm752, %v994
        %1024 = vst.msk [vmem:[#allocation4 + $0xf8] sm:$0xff] %vm752, %v996
        %1025 = vst.msk [vmem:[#allocation4 + $0x110] sm:$0xff] %vm752, %v998
        %1026 = vst.msk [vmem:[#allocation4 + $0x128] sm:$0xff] %vm752, %v1000
        %v1027 = vld [vmem:[#allocation3 + $0x1a] sm:$0xff]
        %v1028 = vld [vmem:[#allocation3 + $0x22] sm:$0xff]
        %v1029 = vld [vmem:[#allocation3 + $0x2a] sm:$0xff]
        %v1030 = vld [vmem:[#allocation3 + $0x32] sm:$0xff]
        %v1031 = vld [vmem:[#allocation3 + $0x3a] sm:$0xff]
        %v1032 = vld [vmem:[#allocation3 + $0x42] sm:$0xff]
        %v1033 = vld [vmem:[#allocation3 + $0x4a] sm:$0xff]
        %v1034 = vld [vmem:[#allocation3 + $0x52] sm:$0xff]
        %v1035 = vld [vmem:[#allocation3 + $0x5a] sm:$0xff]
        %v1036 = vld [vmem:[#allocation3 + $0x62] sm:$0xff]
        %v1037 = vld [vmem:[#allocation3 + $0x6a] sm:$0xff]
        %v1038 = vld [vmem:[#allocation3 + $0x72] sm:$0xff]
        %v1039 = vld [vmem:[#allocation3 + $0x7a] sm:$0xff]
        %1053 = vrot.lane.b32.xlu0 %v1027, 96
        %v1054 = vpop.permute.xlu0 %1053
        %1055 = vrot.lane.b32.xlu0 %v1028, 96
        %v1056 = vpop.permute.xlu0 %1055
        %1057 = vrot.lane.b32.xlu0 %v1029, 96
        %v1058 = vpop.permute.xlu0 %1057
        %1059 = vrot.lane.b32.xlu0 %v1030, 96
        %v1060 = vpop.permute.xlu0 %1059
        %1061 = vrot.lane.b32.xlu0 %v1031, 96
        %v1062 = vpop.permute.xlu0 %1061
        %1063 = vrot.lane.b32.xlu0 %v1032, 96
        %v1064 = vpop.permute.xlu0 %1063
        %1065 = vrot.lane.b32.xlu0 %v1033, 96
        %v1066 = vpop.permute.xlu0 %1065
        %1067 = vrot.lane.b32.xlu0 %v1034, 96
        %v1068 = vpop.permute.xlu0 %1067
        %1069 = vrot.lane.b32.xlu0 %v1035, 96
        %v1070 = vpop.permute.xlu0 %1069
        %1071 = vrot.lane.b32.xlu0 %v1036, 96
        %v1072 = vpop.permute.xlu0 %1071
        %1073 = vrot.lane.b32.xlu0 %v1037, 96
        %v1074 = vpop.permute.xlu0 %1073
        %1075 = vrot.lane.b32.xlu0 %v1038, 96
        %v1076 = vpop.permute.xlu0 %1075
        %1077 = vrot.lane.b32.xlu0 %v1039, 96
        %v1078 = vpop.permute.xlu0 %1077
        %1092 = vst.msk [vmem:[#allocation4 + $0x8] sm:$0xff] %vm831, %v1054
        %1093 = vst.msk [vmem:[#allocation4 + $0x20] sm:$0xff] %vm831, %v1056
        %1094 = vst.msk [vmem:[#allocation4 + $0x38] sm:$0xff] %vm831, %v1058
        %1095 = vst.msk [vmem:[#allocation4 + $0x50] sm:$0xff] %vm831, %v1060
        %1096 = vst.msk [vmem:[#allocation4 + $0x68] sm:$0xff] %vm831, %v1062
        %1097 = vst.msk [vmem:[#allocation4 + $0x80] sm:$0xff] %vm831, %v1064
        %1098 = vst.msk [vmem:[#allocation4 + $0x98] sm:$0xff] %vm831, %v1066
        %1099 = vst.msk [vmem:[#allocation4 + $0xb0] sm:$0xff] %vm831, %v1068
        %1100 = vst.msk [vmem:[#allocation4 + $0xc8] sm:$0xff] %vm831, %v1070
        %1101 = vst.msk [vmem:[#allocation4 + $0xe0] sm:$0xff] %vm831, %v1072
        %1102 = vst.msk [vmem:[#allocation4 + $0xf8] sm:$0xff] %vm831, %v1074
        %1103 = vst.msk [vmem:[#allocation4 + $0x110] sm:$0xff] %vm831, %v1076
        %1104 = vst.msk [vmem:[#allocation4 + $0x128] sm:$0xff] %vm831, %v1078
        %v1105 = vld [vmem:[#allocation3 + $0x1b] sm:$0xff]
        %v1106 = vld [vmem:[#allocation3 + $0x23] sm:$0xff]
        %v1107 = vld [vmem:[#allocation3 + $0x2b] sm:$0xff]
        %v1108 = vld [vmem:[#allocation3 + $0x33] sm:$0xff]
        %v1109 = vld [vmem:[#allocation3 + $0x3b] sm:$0xff]
        %v1110 = vld [vmem:[#allocation3 + $0x43] sm:$0xff]
        %v1111 = vld [vmem:[#allocation3 + $0x4b] sm:$0xff]
        %v1112 = vld [vmem:[#allocation3 + $0x53] sm:$0xff]
        %v1113 = vld [vmem:[#allocation3 + $0x5b] sm:$0xff]
        %v1114 = vld [vmem:[#allocation3 + $0x63] sm:$0xff]
        %v1115 = vld [vmem:[#allocation3 + $0x6b] sm:$0xff]
        %v1116 = vld [vmem:[#allocation3 + $0x73] sm:$0xff]
        %v1117 = vld [vmem:[#allocation3 + $0x7b] sm:$0xff]
        %1118 = vst.msk [vmem:[#allocation4 + $0x10] sm:$0xff] %vm532, %v1105
        %1119 = vst.msk [vmem:[#allocation4 + $0x28] sm:$0xff] %vm532, %v1106
        %1120 = vst.msk [vmem:[#allocation4 + $0x40] sm:$0xff] %vm532, %v1107
        %1121 = vst.msk [vmem:[#allocation4 + $0x58] sm:$0xff] %vm532, %v1108
        %1122 = vst.msk [vmem:[#allocation4 + $0x70] sm:$0xff] %vm532, %v1109
        %1123 = vst.msk [vmem:[#allocation4 + $0x88] sm:$0xff] %vm532, %v1110
        %1124 = vst.msk [vmem:[#allocation4 + $0xa0] sm:$0xff] %vm532, %v1111
        %1125 = vst.msk [vmem:[#allocation4 + $0xb8] sm:$0xff] %vm532, %v1112
        %1126 = vst.msk [vmem:[#allocation4 + $0xd0] sm:$0xff] %vm532, %v1113
        %1127 = vst.msk [vmem:[#allocation4 + $0xe8] sm:$0xff] %vm532, %v1114
        %1128 = vst.msk [vmem:[#allocation4 + $0x100] sm:$0xff] %vm532, %v1115
        %1129 = vst.msk [vmem:[#allocation4 + $0x118] sm:$0xff] %vm532, %v1116
        %1130 = vst.msk [vmem:[#allocation4 + $0x130] sm:$0xff] %vm532, %v1117
        %v1131 = vld [vmem:[#allocation4] sm:$0xff]
        %v1132 = vld [vmem:[#allocation4 + $0x8] sm:$0xff]
        %v1133 = vld [vmem:[#allocation4 + $0x10] sm:$0xff]
        %v1134 = vld [vmem:[#allocation4 + $0x18] sm:$0xff]
        %v1135 = vld [vmem:[#allocation4 + $0x20] sm:$0xff]
        %v1136 = vld [vmem:[#allocation4 + $0x28] sm:$0xff]
        %v1137 = vld [vmem:[#allocation4 + $0x30] sm:$0xff]
        %v1138 = vld [vmem:[#allocation4 + $0x38] sm:$0xff]
        %v1139 = vld [vmem:[#allocation4 + $0x40] sm:$0xff]
        %v1140 = vld [vmem:[#allocation4 + $0x48] sm:$0xff]
        %v1141 = vld [vmem:[#allocation4 + $0x50] sm:$0xff]
        %v1142 = vld [vmem:[#allocation4 + $0x58] sm:$0xff]
        %v1143 = vld [vmem:[#allocation4 + $0x60] sm:$0xff]
        %v1144 = vld [vmem:[#allocation4 + $0x68] sm:$0xff]
        %v1145 = vld [vmem:[#allocation4 + $0x70] sm:$0xff]
        %v1146 = vld [vmem:[#allocation4 + $0x78] sm:$0xff]
        %v1147 = vld [vmem:[#allocation4 + $0x80] sm:$0xff]
        %v1148 = vld [vmem:[#allocation4 + $0x88] sm:$0xff]
        %v1149 = vld [vmem:[#allocation4 + $0x90] sm:$0xff]
        %v1150 = vld [vmem:[#allocation4 + $0x98] sm:$0xff]
        %v1151 = vld [vmem:[#allocation4 + $0xa0] sm:$0xff]
        %v1152 = vld [vmem:[#allocation4 + $0xa8] sm:$0xff]
        %v1153 = vld [vmem:[#allocation4 + $0xb0] sm:$0xff]
        %v1154 = vld [vmem:[#allocation4 + $0xb8] sm:$0xff]
        %v1155 = vld [vmem:[#allocation4 + $0xc0] sm:$0xff]
        %v1156 = vld [vmem:[#allocation4 + $0xc8] sm:$0xff]
        %v1157 = vld [vmem:[#allocation4 + $0xd0] sm:$0xff]
        %v1158 = vld [vmem:[#allocation4 + $0xd8] sm:$0xff]
        %v1159 = vld [vmem:[#allocation4 + $0xe0] sm:$0xff]
        %v1160 = vld [vmem:[#allocation4 + $0xe8] sm:$0xff]
        %v1161 = vld [vmem:[#allocation4 + $0xf0] sm:$0xff]
        %v1162 = vld [vmem:[#allocation4 + $0xf8] sm:$0xff]
        %v1163 = vld [vmem:[#allocation4 + $0x100] sm:$0xff]
        %v1164 = vld [vmem:[#allocation4 + $0x108] sm:$0xff]
        %v1165 = vld [vmem:[#allocation4 + $0x110] sm:$0xff]
        %v1166 = vld [vmem:[#allocation4 + $0x118] sm:$0xff]
        %v1167 = vld [vmem:[#allocation4 + $0x120] sm:$0xff]
        %v1168 = vld [vmem:[#allocation4 + $0x128] sm:$0xff]
        %v1169 = vld [vmem:[#allocation4 + $0x130] sm:$0xff]
        %v1170 = vpack.c.bf16 %v1134, %v1131
        %v1171 = vpack.c.bf16 %v1135, %v1132
        %v1172 = vpack.c.bf16 %v1136, %v1133
        %v1173 = vpack.c.bf16 %v1140, %v1137
        %v1174 = vpack.c.bf16 %v1141, %v1138
        %v1175 = vpack.c.bf16 %v1142, %v1139
        %v1176 = vpack.c.bf16 %v1146, %v1143
        %v1177 = vpack.c.bf16 %v1147, %v1144
        %v1178 = vpack.c.bf16 %v1148, %v1145
        %v1179 = vpack.c.bf16 %v1152, %v1149
        %v1180 = vpack.c.bf16 %v1153, %v1150
        %v1181 = vpack.c.bf16 %v1154, %v1151
        %v1182 = vpack.c.bf16 %v1158, %v1155
        %v1183 = vpack.c.bf16 %v1159, %v1156
        %v1184 = vpack.c.bf16 %v1160, %v1157
        %v1185 = vpack.c.bf16 %v1164, %v1161
        %v1186 = vpack.c.bf16 %v1165, %v1162
        %v1187 = vpack.c.bf16 %v1166, %v1163
        %v1188 = vpack.c.bf16 %v1167, %v1167
        %v1189 = vpack.c.bf16 %v1168, %v1168
        %v1190 = vpack.c.bf16 %v1169, %v1169
        %v1191 = vld [vmem:[%s3] sm:$0xf]
        %v1192 = vld [vmem:[%s3 + $0x4] sm:$0xf]
        %v1193 = vld [vmem:[%s3 + $0x8] sm:$0xf]
        %v1194 = vld [vmem:[%s3 + $0xc] sm:$0xf]
        %v1195 = vld [vmem:[%s3 + $0x10] sm:$0xf]
        %v1196 = vld [vmem:[%s3 + $0x14] sm:$0xf]
        %v1197 = vld [vmem:[%s3 + $0x18] sm:$0xf]
        %v1198 = vld [vmem:[%s3 + $0x1c] sm:$0xf]
        %v1199 = vld [vmem:[%s3 + $0x20] sm:$0xf]
        %v1200 = vld [vmem:[%s3 + $0x24] sm:$0xf]
        %v1201 = vld [vmem:[%s3 + $0x28] sm:$0xf]
        %v1202 = vld [vmem:[%s3 + $0x2c] sm:$0xf]
        %v1203 = vld [vmem:[%s3 + $0x30] sm:$0xf]
        %v1204 = vld [vmem:[%s3 + $0x34] sm:$0xf]
        %v1205 = vld [vmem:[%s3 + $0x38] sm:$0xf]
        %v1206 = vld [vmem:[%s3 + $0x3c] sm:$0xf]
        %v1207 = vld [vmem:[%s3 + $0x40] sm:$0xf]
        %v1208 = vld [vmem:[%s3 + $0x44] sm:$0xf]
        %v1209 = vld [vmem:[%s3 + $0x48] sm:$0xf]
        %v1210 = vld [vmem:[%s3 + $0x4c] sm:$0xf]
        %v1211 = vld [vmem:[%s3 + $0x50] sm:$0xf]
        %v1212 = vld [vmem:[%s3 + $0x54] sm:$0xf]
        %v1213 = vld [vmem:[%s3 + $0x58] sm:$0xf]
        %v1214 = vld [vmem:[%s3 + $0x5c] sm:$0xf]
        %v1215 = vld [vmem:[%s3 + $0x60] sm:$0xf]
        %v1216 = vld [vmem:[%s3 + $0x64] sm:$0xf]
        %v1217 = vld [vmem:[%s3 + $0x68] sm:$0xf]
        %v1218 = vld [vmem:[%s3 + $0x6c] sm:$0xf]
        %v1219 = vld [vmem:[%s3 + $0x70] sm:$0xf]
        %v1220 = vld [vmem:[%s3 + $0x74] sm:$0xf]
        %v1221 = vld [vmem:[%s3 + $0x78] sm:$0xf]
        %v1222 = vld [vmem:[%s3 + $0x7c] sm:$0xf]
        %v1223 = vld [vmem:[%s3 + $0x80] sm:$0xf]
        %v1224 = vld [vmem:[%s3 + $0x84] sm:$0xf]
        %v1225 = vld [vmem:[%s3 + $0x88] sm:$0xf]
        %v1226 = vld [vmem:[%s3 + $0x8c] sm:$0xf]
        %v1228 = vperm.slane %v581, 0
        %v1266 = vunpack.c.l.b16 %v1191
        %v1267 = vunpack.c.l.b16 %v1192
        %v1268 = vunpack.c.l.b16 %v1193
        %v1269 = vunpack.c.l.b16 %v1194
        %v1270 = vunpack.c.l.b16 %v1195
        %v1271 = vunpack.c.l.b16 %v1196
        %v1272 = vunpack.c.l.b16 %v1197
        %v1273 = vunpack.c.l.b16 %v1198
        %v1274 = vunpack.c.l.b16 %v1199
        %v1275 = vunpack.c.l.b16 %v1200
        %v1276 = vunpack.c.l.b16 %v1201
        %v1277 = vunpack.c.l.b16 %v1202
        %v1278 = vunpack.c.l.b16 %v1203
        %v1279 = vunpack.c.l.b16 %v1204
        %v1280 = vunpack.c.l.b16 %v1205
        %v1281 = vunpack.c.l.b16 %v1206
        %v1282 = vunpack.c.l.b16 %v1207
        %v1283 = vunpack.c.l.b16 %v1208
        %v1284 = vunpack.c.l.b16 %v1209
        %v1285 = vunpack.c.l.b16 %v1210
        %v1286 = vunpack.c.l.b16 %v1211
        %v1287 = vunpack.c.l.b16 %v1212
        %v1288 = vunpack.c.l.b16 %v1213
        %v1289 = vunpack.c.l.b16 %v1214
        %v1290 = vunpack.c.l.b16 %v1215
        %v1291 = vunpack.c.l.b16 %v1216
        %v1292 = vunpack.c.l.b16 %v1217
        %v1293 = vunpack.c.l.b16 %v1218
        %v1294 = vunpack.c.l.b16 %v1219
        %v1295 = vunpack.c.l.b16 %v1220
        %v1296 = vunpack.c.l.b16 %v1221
        %v1297 = vunpack.c.l.b16 %v1222
        %v1298 = vunpack.c.l.b16 %v1223
        %v1299 = vunpack.c.l.b16 %v1224
        %v1300 = vunpack.c.l.b16 %v1225
        %v1301 = vunpack.c.l.b16 %v1226
        %v1302 = vpack.c.b16 %v1267, %v1266
        %v1303 = vpack.c.b16 %v1269, %v1268
        %v1304 = vpack.c.b16 %v1271, %v1270
        %v1305 = vpack.c.b16 %v1273, %v1272
        %v1306 = vpack.c.b16 %v1275, %v1274
        %v1307 = vpack.c.b16 %v1277, %v1276
        %v1308 = vpack.c.b16 %v1279, %v1278
        %v1309 = vpack.c.b16 %v1281, %v1280
        %v1310 = vpack.c.b16 %v1283, %v1282
        %v1311 = vpack.c.b16 %v1285, %v1284
        %v1312 = vpack.c.b16 %v1287, %v1286
        %v1313 = vpack.c.b16 %v1289, %v1288
        %v1314 = vpack.c.b16 %v1291, %v1290
        %v1315 = vpack.c.b16 %v1293, %v1292
        %v1316 = vpack.c.b16 %v1295, %v1294
        %v1317 = vpack.c.b16 %v1297, %v1296
        %v1318 = vpack.c.b16 %v1299, %v1298
        %v1319 = vpack.c.b16 %v1301, %v1300
        %v1339 = vsel %vm532, %v1172, 0
        %v1342 = vsel %vm532, %v1175, 0
        %v1345 = vsel %vm532, %v1178, 0
        %v1348 = vsel %vm532, %v1181, 0
        %v1351 = vsel %vm532, %v1184, 0
        %v1354 = vsel %vm532, %v1187, 0
        %v1357 = vsel %vm532, %v1190, 0
        %1359 = vmatpush.bf16.msra.mxu0 %v1309
        %1360 = vmatpush.bf16.msra.mxu0 %v1308
        %1361 = vmatpush.bf16.msra.mxu0 %v1307
        %1362 = vmatpush.bf16.msra.mxu0 %v1306
        %1363 = vmatpush.bf16.msra.mxu0 %v1305
        %1364 = vmatpush.bf16.msra.mxu0 %v1304
        %1365 = vmatpush.bf16.msra.mxu0 %v1303
        %1366 = vmatpush.bf16.msra.mxu0 %v1302
        %1367 = vmatmul.bf16.gmra.mxu0 %v1170
        %v1368 = vpop.f32.mrf.mxu0
        %v1369 = vadd.f32 %v1228, %v1368
        %v1370 = vpop.f32.mrf.mxu0
        %v1371 = vadd.f32 %v1228, %v1370
        %1372 = vmatmul.bf16.gmra.mxu0 %v1173
        %v1373 = vpop.f32.mrf.mxu0
        %v1374 = vadd.f32 %v1228, %v1373
        %v1375 = vpop.f32.mrf.mxu0
        %v1376 = vadd.f32 %v1228, %v1375
        %1377 = vmatmul.bf16.gmra.mxu0 %v1176
        %v1378 = vpop.f32.mrf.mxu0
        %v1379 = vadd.f32 %v1228, %v1378
        %v1380 = vpop.f32.mrf.mxu0
        %v1381 = vadd.f32 %v1228, %v1380
        %1382 = vmatmul.bf16.gmra.mxu0 %v1179
        %v1383 = vpop.f32.mrf.mxu0
        %v1384 = vadd.f32 %v1228, %v1383
        %v1385 = vpop.f32.mrf.mxu0
        %v1386 = vadd.f32 %v1228, %v1385
        %1387 = vmatmul.bf16.gmra.mxu0 %v1182
        %v1388 = vpop.f32.mrf.mxu0
        %v1389 = vadd.f32 %v1228, %v1388
        %v1390 = vpop.f32.mrf.mxu0
        %v1391 = vadd.f32 %v1228, %v1390
        %1392 = vmatmul.bf16.gmra.mxu0 %v1185
        %v1393 = vpop.f32.mrf.mxu0
        %v1394 = vadd.f32 %v1228, %v1393
        %v1395 = vpop.f32.mrf.mxu0
        %v1396 = vadd.f32 %v1228, %v1395
        %1397 = vmatmul.bf16.gmra.mxu0 %v1188
        %v1398 = vpop.f32.mrf.mxu0
        %v1399 = vadd.f32 %v1228, %v1398
        %v1400 = vpop.f32.mrf.mxu0
        %1401 = vdwg.mxu0
        %1402 = vmatpush.bf16.msra.mxu0 %v1317
        %1403 = vmatpush.bf16.msra.mxu0 %v1316
        %1404 = vmatpush.bf16.msra.mxu0 %v1315
        %1405 = vmatpush.bf16.msra.mxu0 %v1314
        %1406 = vmatpush.bf16.msra.mxu0 %v1313
        %1407 = vmatpush.bf16.msra.mxu0 %v1312
        %1408 = vmatpush.bf16.msra.mxu0 %v1311
        %1409 = vmatpush.bf16.msra.mxu0 %v1310
        %1410 = vmatmul.bf16.gmra.mxu0 %v1171
        %v1411 = vpop.f32.mrf.mxu0
        %v1412 = vadd.f32 %v1369, %v1411
        %v1413 = vpop.f32.mrf.mxu0
        %v1414 = vadd.f32 %v1371, %v1413
        %1415 = vmatmul.bf16.gmra.mxu0 %v1174
        %v1416 = vpop.f32.mrf.mxu0
        %v1417 = vadd.f32 %v1374, %v1416
        %v1418 = vpop.f32.mrf.mxu0
        %v1419 = vadd.f32 %v1376, %v1418
        %1420 = vmatmul.bf16.gmra.mxu0 %v1177
        %v1421 = vpop.f32.mrf.mxu0
        %v1422 = vadd.f32 %v1379, %v1421
        %v1423 = vpop.f32.mrf.mxu0
        %v1424 = vadd.f32 %v1381, %v1423
        %1425 = vmatmul.bf16.gmra.mxu0 %v1180
        %v1426 = vpop.f32.mrf.mxu0
        %v1427 = vadd.f32 %v1384, %v1426
        %v1428 = vpop.f32.mrf.mxu0
        %v1429 = vadd.f32 %v1386, %v1428
        %1430 = vmatmul.bf16.gmra.mxu0 %v1183
        %v1431 = vpop.f32.mrf.mxu0
        %v1432 = vadd.f32 %v1389, %v1431
        %v1433 = vpop.f32.mrf.mxu0
        %v1434 = vadd.f32 %v1391, %v1433
        %1435 = vmatmul.bf16.gmra.mxu0 %v1186
        %v1436 = vpop.f32.mrf.mxu0
        %v1437 = vadd.f32 %v1394, %v1436
        %v1438 = vpop.f32.mrf.mxu0
        %v1439 = vadd.f32 %v1396, %v1438
        %1440 = vmatmul.bf16.gmra.mxu0 %v1189
        %v1441 = vpop.f32.mrf.mxu0
        %v1442 = vadd.f32 %v1399, %v1441
        %v1443 = vpop.f32.mrf.mxu0
        %1444 = vdwg.mxu0
        %1445 = vmatpush.bf16.msra.mxu0 0
        %1446 = vmatpush.bf16.msra.mxu0 0
        %1447 = vmatpush.bf16.msra.mxu0 0
        %1448 = vmatpush.bf16.msra.mxu0 0
        %1449 = vmatpush.bf16.msra.mxu0 0
        %1450 = vmatpush.bf16.msra.mxu0 0
        %1451 = vmatpush.bf16.msra.mxu0 %v1319
        %1452 = vmatpush.bf16.msra.mxu0 %v1318
        %1453 = vmatmul.bf16.gmra.mxu0 %v1339
        %v1454 = vpop.f32.mrf.mxu0
        %v1455 = vadd.f32 %v1412, %v1454
        %v1456 = vpop.f32.mrf.mxu0
        %v1457 = vadd.f32 %v1414, %v1456
        %1458 = vmatmul.bf16.gmra.mxu0 %v1342
        %v1459 = vpop.f32.mrf.mxu0
        %v1460 = vadd.f32 %v1417, %v1459
        %v1461 = vpop.f32.mrf.mxu0
        %v1462 = vadd.f32 %v1419, %v1461
        %1463 = vmatmul.bf16.gmra.mxu0 %v1345
        %v1464 = vpop.f32.mrf.mxu0
        %v1465 = vadd.f32 %v1422, %v1464
        %v1466 = vpop.f32.mrf.mxu0
        %v1467 = vadd.f32 %v1424, %v1466
        %1468 = vmatmul.bf16.gmra.mxu0 %v1348
        %v1469 = vpop.f32.mrf.mxu0
        %v1470 = vadd.f32 %v1427, %v1469
        %v1471 = vpop.f32.mrf.mxu0
        %v1472 = vadd.f32 %v1429, %v1471
        %1473 = vmatmul.bf16.gmra.mxu0 %v1351
        %v1474 = vpop.f32.mrf.mxu0
        %v1475 = vadd.f32 %v1432, %v1474
        %v1476 = vpop.f32.mrf.mxu0
        %v1477 = vadd.f32 %v1434, %v1476
        %1478 = vmatmul.bf16.gmra.mxu0 %v1354
        %v1479 = vpop.f32.mrf.mxu0
        %v1480 = vadd.f32 %v1437, %v1479
        %v1481 = vpop.f32.mrf.mxu0
        %v1482 = vadd.f32 %v1439, %v1481
        %1483 = vmatmul.bf16.gmra.mxu0 %v1357
        %v1484 = vpop.f32.mrf.mxu0
        %v1485 = vadd.f32 %v1442, %v1484
        %v1486 = vpop.f32.mrf.mxu0
        %1487 = vdwg.mxu0
        %v1488 = vmax.f32 %v1455, 0.0
        %v1489 = vmax.f32 %v1457, 0.0
        %v1490 = vmax.f32 %v1460, 0.0
        %v1491 = vmax.f32 %v1462, 0.0
        %v1492 = vmax.f32 %v1465, 0.0
        %v1493 = vmax.f32 %v1467, 0.0
        %v1494 = vmax.f32 %v1470, 0.0
        %v1495 = vmax.f32 %v1472, 0.0
        %v1496 = vmax.f32 %v1475, 0.0
        %v1497 = vmax.f32 %v1477, 0.0
        %v1498 = vmax.f32 %v1480, 0.0
        %v1499 = vmax.f32 %v1482, 0.0
        %v1500 = vmax.f32 %v1485, 0.0
        %vm1501 = vcmask 523264
        %1502 = vst.msk [vmem:[#allocation5] sm:$0xff] %vm1501, %v1488
        %1503 = vst.msk [vmem:[#allocation5 + $0x8] sm:$0xff] %vm1501, %v1489
        %1504 = vst.msk [vmem:[#allocation5 + $0x10] sm:$0xff] %vm1501, %v1490
        %1505 = vst.msk [vmem:[#allocation5 + $0x18] sm:$0xff] %vm1501, %v1491
        %1506 = vst.msk [vmem:[#allocation5 + $0x20] sm:$0xff] %vm1501, %v1492
        %1507 = vst.msk [vmem:[#allocation5 + $0x28] sm:$0xff] %vm1501, %v1493
        %1508 = vst.msk [vmem:[#allocation5 + $0x30] sm:$0xff] %vm1501, %v1494
        %1509 = vst.msk [vmem:[#allocation5 + $0x38] sm:$0xff] %vm1501, %v1495
        %1510 = vst.msk [vmem:[#allocation5 + $0x40] sm:$0xff] %vm1501, %v1496
        %1511 = vst.msk [vmem:[#allocation5 + $0x48] sm:$0xff] %vm1501, %v1497
        %1512 = vst.msk [vmem:[#allocation5 + $0x50] sm:$0xff] %vm1501, %v1498
        %1513 = vst.msk [vmem:[#allocation5 + $0x58] sm:$0xff] %vm1501, %v1499
        %1514 = vst.msk [vmem:[#allocation5 + $0x60] sm:$0xff] %vm1501, %v1500
        %1515 = vst.msk [vmem:[#allocation6] sm:$0xff] %vm1501, 0.0
        %vm1516 = vcmask 522240
        %1517 = vst.msk [vmem:[#allocation6 + $0x8] sm:$0x7f] %vm1516, 0.0
        loop: start=0, step=1, limit=4
        $region71: #{moe_forward_pallas.1} parent=55 // loop_pre_header
          _
        $region72: #{moe_forward_pallas.1} parent=55 // loop_header
          %s1519 = sphi 0, %s1523
          %p1520 = scmp.ge.s32.totalorder %s1519, 4
        $region73: #{moe_forward_pallas.1} parent=55 // loop_header_branch
          %1522 = sbr.rel (%p1520) target = $region77
        $region74: #{moe_forward_pallas.1} parent=55 // loop_body
          %s1524 = smul.u32 %s1519, 2
          %s1525 = sadd.s32 %s1524, 1
          %s1526 = smul.u32 %s1525, 10
          %s1527 = scalar_lea.vmem [#allocation5], %s1526
          %v1528 = vld [vmem:[%s1527] sm:$0xff]
          %v1529 = vld [vmem:[%s1527 + $0x8] sm:$0x3]
          %s1530 = sadd.s32 %s1526, 10
          %s1531 = scalar_lea.vmem [#allocation5], %s1530
          %v1532 = vld [vmem:[%s1531] sm:$0xff]
          %v1533 = vld [vmem:[%s1531 + $0x8] sm:$0x3]
          %v1534 = vmax.f32 %v1528, %v1532
          %v1535 = vmax.f32 %v1529, %v1533
          %1536 = vst.msk [vmem:[#allocation10] sm:$0xff] %vm1501, %v1534
          %vm1537 = vcmask 517120
          %1538 = vst.msk [vmem:[#allocation10 + $0x8] sm:$0x3] %vm1537, %v1535
          %s1539 = scalar_lea.vmem [#allocation10], 1
          %v1540 = vld [vmem:[%s1539] ss:$2 sm:$0xf]
          %s1541 = scalar_lea.vmem [#allocation10], 2
          %v1542 = vld [vmem:[%s1541] ss:$2 sm:$0xf]
          %s1543 = sadd.s32 %s1519, 1
          %s1544 = smul.u32 %s1543, 6
          %s1545 = sadd.s32 %s1544, 9
          %v1546 = vmax.f32 %v1540, %v1542
          %s1547 = scalar_lea.vmem [#allocation6], %s1545
          %vm1548 = vcmask 519168
          %1549 = vst.msk [vmem:[%s1547] sm:$0xf] %vm1548, %v1546
          %s1550 = sadd.s32 %s1544, 13
          %s1551 = scalar_lea.vmem [#allocation6], %s1550
          %1552 = vst.msk [vmem:[%s1551] sm:$0x3] %vm1537, 0.0
        $region75: #{moe_forward_pallas.1} parent=55 // loop_footer
          %s1523 = sadd.s32 1, %s1519
        $region76: #{moe_forward_pallas.1} parent=55 // loop_footer_branch
          %1518 = sbr.rel target = $region72
        $region77: #{moe_forward_pallas.1} parent=55 // loop_exit
          _
        %1553 = vst.msk [vmem:[#allocation6 + $0x27] sm:$0xff] %vm1501, 0.0
        %1554 = vst.msk [vmem:[#allocation6 + $0x2f] sm:$0xff] %vm1501, 0.0
        %vm1555 = vcmask 516096
        %1556 = vst.msk [vmem:[#allocation6 + $0x37] sm:$0x1] %vm1555, 0.0
        %v1557 = vld [vmem:[%s6] sm:$0x1]
        %v1558 = vld [vmem:[#allocation6 + $0x1] sm:$0xff]
        %v1559 = vld [vmem:[#allocation6 + $0x9] sm:$0xff]
        %v1560 = vld [vmem:[#allocation6 + $0x11] sm:$0xff]
        %v1561 = vld [vmem:[#allocation6 + $0x19] sm:$0xff]
        %v1562 = vld [vmem:[#allocation6 + $0x21] sm:$0xff]
        %1563 = vst.msk [vmem:[#allocation7] sm:$0xff] %vm1501, %v1558
        %1564 = vst.msk [vmem:[#allocation7 + $0x28] sm:$0xff] %vm1501, %v1559
        %1565 = vst.msk [vmem:[#allocation7 + $0x50] sm:$0xff] %vm1501, %v1560
        %1566 = vst.msk [vmem:[#allocation7 + $0x78] sm:$0xff] %vm1501, %v1561
        %1567 = vst.msk [vmem:[#allocation7 + $0xa0] sm:$0xff] %vm1501, %v1562
        %v1568 = vld [vmem:[#allocation6 + $0x2] sm:$0xff]
        %v1569 = vld [vmem:[#allocation6 + $0xa] sm:$0xff]
        %v1570 = vld [vmem:[#allocation6 + $0x12] sm:$0xff]
        %v1571 = vld [vmem:[#allocation6 + $0x1a] sm:$0xff]
        %v1572 = vld [vmem:[#allocation6 + $0x22] sm:$0xff]
        %1578 = vrot.lane.b32.xlu0 %v1568, 64
        %v1579 = vpop.permute.xlu0 %1578
        %1580 = vrot.lane.b32.xlu0 %v1569, 64
        %v1581 = vpop.permute.xlu0 %1580
        %1582 = vrot.lane.b32.xlu0 %v1570, 64
        %v1583 = vpop.permute.xlu0 %1582
        %1584 = vrot.lane.b32.xlu0 %v1571, 64
        %v1585 = vpop.permute.xlu0 %1584
        %1586 = vrot.lane.b32.xlu0 %v1572, 64
        %v1587 = vpop.permute.xlu0 %1586
        %vm1593 = vcmask 1048064
        %1594 = vst.msk [vmem:[#allocation7] sm:$0xff] %vm1593, %v1579
        %1595 = vst.msk [vmem:[#allocation7 + $0x28] sm:$0xff] %vm1593, %v1581
        %1596 = vst.msk [vmem:[#allocation7 + $0x50] sm:$0xff] %vm1593, %v1583
        %1597 = vst.msk [vmem:[#allocation7 + $0x78] sm:$0xff] %vm1593, %v1585
        %1598 = vst.msk [vmem:[#allocation7 + $0xa0] sm:$0xff] %vm1593, %v1587
        %v1599 = vld [vmem:[#allocation6 + $0x3] sm:$0xff]
        %v1600 = vld [vmem:[#allocation6 + $0xb] sm:$0xff]
        %v1601 = vld [vmem:[#allocation6 + $0x13] sm:$0xff]
        %v1602 = vld [vmem:[#allocation6 + $0x1b] sm:$0xff]
        %v1603 = vld [vmem:[#allocation6 + $0x23] sm:$0xff]
        %1604 = vst.msk [vmem:[#allocation7 + $0x8] sm:$0xff] %vm1501, %v1599
        %1605 = vst.msk [vmem:[#allocation7 + $0x30] sm:$0xff] %vm1501, %v1600
        %1606 = vst.msk [vmem:[#allocation7 + $0x58] sm:$0xff] %vm1501, %v1601
        %1607 = vst.msk [vmem:[#allocation7 + $0x80] sm:$0xff] %vm1501, %v1602
        %1608 = vst.msk [vmem:[#allocation7 + $0xa8] sm:$0xff] %vm1501, %v1603
        %v1609 = vld [vmem:[#allocation6 + $0x7] sm:$0xff]
        %v1610 = vld [vmem:[#allocation6 + $0xf] sm:$0xff]
        %v1611 = vld [vmem:[#allocation6 + $0x17] sm:$0xff]
        %v1612 = vld [vmem:[#allocation6 + $0x1f] sm:$0xff]
        %v1613 = vld [vmem:[#allocation6 + $0x27] sm:$0xff]
        %1619 = vrot.lane.b32.xlu0 %v1609, 64
        %v1620 = vpop.permute.xlu0 %1619
        %1621 = vrot.lane.b32.xlu0 %v1610, 64
        %v1622 = vpop.permute.xlu0 %1621
        %1623 = vrot.lane.b32.xlu0 %v1611, 64
        %v1624 = vpop.permute.xlu0 %1623
        %1625 = vrot.lane.b32.xlu0 %v1612, 64
        %v1626 = vpop.permute.xlu0 %1625
        %1627 = vrot.lane.b32.xlu0 %v1613, 64
        %v1628 = vpop.permute.xlu0 %1627
        %1634 = vst.msk [vmem:[#allocation7 + $0x8] sm:$0xff] %vm1593, %v1620
        %1635 = vst.msk [vmem:[#allocation7 + $0x30] sm:$0xff] %vm1593, %v1622
        %1636 = vst.msk [vmem:[#allocation7 + $0x58] sm:$0xff] %vm1593, %v1624
        %1637 = vst.msk [vmem:[#allocation7 + $0x80] sm:$0xff] %vm1593, %v1626
        %1638 = vst.msk [vmem:[#allocation7 + $0xa8] sm:$0xff] %vm1593, %v1628
        %v1639 = vld [vmem:[#allocation6 + $0x8] sm:$0xff]
        %v1640 = vld [vmem:[#allocation6 + $0x10] sm:$0xff]
        %v1641 = vld [vmem:[#allocation6 + $0x18] sm:$0xff]
        %v1642 = vld [vmem:[#allocation6 + $0x20] sm:$0xff]
        %v1643 = vld [vmem:[#allocation6 + $0x28] sm:$0xff]
        %1644 = vst.msk [vmem:[#allocation7 + $0x10] sm:$0xff] %vm1501, %v1639
        %1645 = vst.msk [vmem:[#allocation7 + $0x38] sm:$0xff] %vm1501, %v1640
        %1646 = vst.msk [vmem:[#allocation7 + $0x60] sm:$0xff] %vm1501, %v1641
        %1647 = vst.msk [vmem:[#allocation7 + $0x88] sm:$0xff] %vm1501, %v1642
        %1648 = vst.msk [vmem:[#allocation7 + $0xb0] sm:$0xff] %vm1501, %v1643
        %v1649 = vld [vmem:[#allocation6 + $0x9] sm:$0xff]
        %v1650 = vld [vmem:[#allocation6 + $0x11] sm:$0xff]
        %v1651 = vld [vmem:[#allocation6 + $0x19] sm:$0xff]
        %v1652 = vld [vmem:[#allocation6 + $0x21] sm:$0xff]
        %v1653 = vld [vmem:[#allocation6 + $0x29] sm:$0xff]
        %1659 = vrot.lane.b32.xlu0 %v1649, 64
        %v1660 = vpop.permute.xlu0 %1659
        %1661 = vrot.lane.b32.xlu0 %v1650, 64
        %v1662 = vpop.permute.xlu0 %1661
        %1663 = vrot.lane.b32.xlu0 %v1651, 64
        %v1664 = vpop.permute.xlu0 %1663
        %1665 = vrot.lane.b32.xlu0 %v1652, 64
        %v1666 = vpop.permute.xlu0 %1665
        %1667 = vrot.lane.b32.xlu0 %v1653, 64
        %v1668 = vpop.permute.xlu0 %1667
        %1674 = vst.msk [vmem:[#allocation7 + $0x10] sm:$0xff] %vm1593, %v1660
        %1675 = vst.msk [vmem:[#allocation7 + $0x38] sm:$0xff] %vm1593, %v1662
        %1676 = vst.msk [vmem:[#allocation7 + $0x60] sm:$0xff] %vm1593, %v1664
        %1677 = vst.msk [vmem:[#allocation7 + $0x88] sm:$0xff] %vm1593, %v1666
        %1678 = vst.msk [vmem:[#allocation7 + $0xb0] sm:$0xff] %vm1593, %v1668
        %v1679 = vld [vmem:[#allocation6 + $0xd] sm:$0xff]
        %v1680 = vld [vmem:[#allocation6 + $0x15] sm:$0xff]
        %v1681 = vld [vmem:[#allocation6 + $0x1d] sm:$0xff]
        %v1682 = vld [vmem:[#allocation6 + $0x25] sm:$0xff]
        %v1683 = vld [vmem:[#allocation6 + $0x2d] sm:$0xff]
        %1684 = vst.msk [vmem:[#allocation7 + $0x18] sm:$0xff] %vm1501, %v1679
        %1685 = vst.msk [vmem:[#allocation7 + $0x40] sm:$0xff] %vm1501, %v1680
        %1686 = vst.msk [vmem:[#allocation7 + $0x68] sm:$0xff] %vm1501, %v1681
        %1687 = vst.msk [vmem:[#allocation7 + $0x90] sm:$0xff] %vm1501, %v1682
        %1688 = vst.msk [vmem:[#allocation7 + $0xb8] sm:$0xff] %vm1501, %v1683
        %v1689 = vld [vmem:[#allocation6 + $0xe] sm:$0xff]
        %v1690 = vld [vmem:[#allocation6 + $0x16] sm:$0xff]
        %v1691 = vld [vmem:[#allocation6 + $0x1e] sm:$0xff]
        %v1692 = vld [vmem:[#allocation6 + $0x26] sm:$0xff]
        %v1693 = vld [vmem:[#allocation6 + $0x2e] sm:$0xff]
        %1699 = vrot.lane.b32.xlu0 %v1689, 64
        %v1700 = vpop.permute.xlu0 %1699
        %1701 = vrot.lane.b32.xlu0 %v1690, 64
        %v1702 = vpop.permute.xlu0 %1701
        %1703 = vrot.lane.b32.xlu0 %v1691, 64
        %v1704 = vpop.permute.xlu0 %1703
        %1705 = vrot.lane.b32.xlu0 %v1692, 64
        %v1706 = vpop.permute.xlu0 %1705
        %1707 = vrot.lane.b32.xlu0 %v1693, 64
        %v1708 = vpop.permute.xlu0 %1707
        %1714 = vst.msk [vmem:[#allocation7 + $0x18] sm:$0xff] %vm1593, %v1700
        %1715 = vst.msk [vmem:[#allocation7 + $0x40] sm:$0xff] %vm1593, %v1702
        %1716 = vst.msk [vmem:[#allocation7 + $0x68] sm:$0xff] %vm1593, %v1704
        %1717 = vst.msk [vmem:[#allocation7 + $0x90] sm:$0xff] %vm1593, %v1706
        %1718 = vst.msk [vmem:[#allocation7 + $0xb8] sm:$0xff] %vm1593, %v1708
        %v1719 = vld [vmem:[#allocation6 + $0xf] sm:$0xff]
        %v1720 = vld [vmem:[#allocation6 + $0x17] sm:$0xff]
        %v1721 = vld [vmem:[#allocation6 + $0x1f] sm:$0xff]
        %v1722 = vld [vmem:[#allocation6 + $0x27] sm:$0xff]
        %v1723 = vld [vmem:[#allocation6 + $0x2f] sm:$0xff]
        %1724 = vst.msk [vmem:[#allocation7 + $0x20] sm:$0xff] %vm1501, %v1719
        %1725 = vst.msk [vmem:[#allocation7 + $0x48] sm:$0xff] %vm1501, %v1720
        %1726 = vst.msk [vmem:[#allocation7 + $0x70] sm:$0xff] %vm1501, %v1721
        %1727 = vst.msk [vmem:[#allocation7 + $0x98] sm:$0xff] %vm1501, %v1722
        %1728 = vst.msk [vmem:[#allocation7 + $0xc0] sm:$0xff] %vm1501, %v1723
        %v1729 = vld [vmem:[#allocation7] sm:$0xff]
        %v1730 = vld [vmem:[#allocation7 + $0x8] sm:$0xff]
        %v1731 = vld [vmem:[#allocation7 + $0x10] sm:$0xff]
        %v1732 = vld [vmem:[#allocation7 + $0x18] sm:$0xff]
        %v1733 = vld [vmem:[#allocation7 + $0x20] sm:$0xff]
        %v1734 = vld [vmem:[#allocation7 + $0x28] sm:$0xff]
        %v1735 = vld [vmem:[#allocation7 + $0x30] sm:$0xff]
        %v1736 = vld [vmem:[#allocation7 + $0x38] sm:$0xff]
        %v1737 = vld [vmem:[#allocation7 + $0x40] sm:$0xff]
        %v1738 = vld [vmem:[#allocation7 + $0x48] sm:$0xff]
        %v1739 = vld [vmem:[#allocation7 + $0x50] sm:$0xff]
        %v1740 = vld [vmem:[#allocation7 + $0x58] sm:$0xff]
        %v1741 = vld [vmem:[#allocation7 + $0x60] sm:$0xff]
        %v1742 = vld [vmem:[#allocation7 + $0x68] sm:$0xff]
        %v1743 = vld [vmem:[#allocation7 + $0x70] sm:$0xff]
        %v1744 = vld [vmem:[#allocation7 + $0x78] sm:$0xff]
        %v1745 = vld [vmem:[#allocation7 + $0x80] sm:$0xff]
        %v1746 = vld [vmem:[#allocation7 + $0x88] sm:$0xff]
        %v1747 = vld [vmem:[#allocation7 + $0x90] sm:$0xff]
        %v1748 = vld [vmem:[#allocation7 + $0x98] sm:$0xff]
        %v1749 = vld [vmem:[#allocation7 + $0xa0] sm:$0xff]
        %v1750 = vld [vmem:[#allocation7 + $0xa8] sm:$0xff]
        %v1751 = vld [vmem:[#allocation7 + $0xb0] sm:$0xff]
        %v1752 = vld [vmem:[#allocation7 + $0xb8] sm:$0xff]
        %v1753 = vld [vmem:[#allocation7 + $0xc0] sm:$0xff]
        %v1754 = vpack.c.bf16 %v1734, %v1729
        %v1755 = vpack.c.bf16 %v1735, %v1730
        %v1756 = vpack.c.bf16 %v1736, %v1731
        %v1757 = vpack.c.bf16 %v1737, %v1732
        %v1758 = vpack.c.bf16 %v1738, %v1733
        %v1759 = vpack.c.bf16 %v1744, %v1739
        %v1760 = vpack.c.bf16 %v1745, %v1740
        %v1761 = vpack.c.bf16 %v1746, %v1741
        %v1762 = vpack.c.bf16 %v1747, %v1742
        %v1763 = vpack.c.bf16 %v1748, %v1743
        %v1764 = vpack.c.bf16 %v1749, %v1749
        %v1765 = vpack.c.bf16 %v1750, %v1750
        %v1766 = vpack.c.bf16 %v1751, %v1751
        %v1767 = vpack.c.bf16 %v1752, %v1752
        %v1768 = vpack.c.bf16 %v1753, %v1753
        %v1769 = vld [vmem:[%s5] sm:$0xf]
        %v1770 = vld [vmem:[%s5 + $0x4] sm:$0xf]
        %v1771 = vld [vmem:[%s5 + $0x8] sm:$0xf]
        %v1772 = vld [vmem:[%s5 + $0xc] sm:$0xf]
        %v1773 = vld [vmem:[%s5 + $0x10] sm:$0xf]
        %v1774 = vld [vmem:[%s5 + $0x14] sm:$0xf]
        %v1775 = vld [vmem:[%s5 + $0x18] sm:$0xf]
        %v1776 = vld [vmem:[%s5 + $0x1c] sm:$0xf]
        %v1777 = vld [vmem:[%s5 + $0x20] sm:$0xf]
        %v1778 = vld [vmem:[%s5 + $0x24] sm:$0xf]
        %v1779 = vld [vmem:[%s5 + $0x28] sm:$0xf]
        %v1780 = vld [vmem:[%s5 + $0x2c] sm:$0xf]
        %v1781 = vld [vmem:[%s5 + $0x30] sm:$0xf]
        %v1782 = vld [vmem:[%s5 + $0x34] sm:$0xf]
        %v1783 = vld [vmem:[%s5 + $0x38] sm:$0xf]
        %v1784 = vld [vmem:[%s5 + $0x3c] sm:$0xf]
        %v1785 = vld [vmem:[%s5 + $0x40] sm:$0xf]
        %v1786 = vld [vmem:[%s5 + $0x44] sm:$0xf]
        %v1787 = vld [vmem:[%s5 + $0x48] sm:$0xf]
        %v1788 = vld [vmem:[%s5 + $0x4c] sm:$0xf]
        %v1789 = vld [vmem:[%s5 + $0x50] sm:$0xf]
        %v1790 = vld [vmem:[%s5 + $0x54] sm:$0xf]
        %v1791 = vld [vmem:[%s5 + $0x58] sm:$0xf]
        %v1792 = vld [vmem:[%s5 + $0x5c] sm:$0xf]
        %v1793 = vld [vmem:[%s5 + $0x60] sm:$0xf]
        %v1794 = vld [vmem:[%s5 + $0x64] sm:$0xf]
        %v1795 = vld [vmem:[%s5 + $0x68] sm:$0xf]
        %v1796 = vld [vmem:[%s5 + $0x6c] sm:$0xf]
        %v1797 = vld [vmem:[%s5 + $0x70] sm:$0xf]
        %v1798 = vld [vmem:[%s5 + $0x74] sm:$0xf]
        %v1799 = vld [vmem:[%s5 + $0x78] sm:$0xf]
        %v1800 = vld [vmem:[%s5 + $0x7c] sm:$0xf]
        %v1801 = vld [vmem:[%s5 + $0x80] sm:$0xf]
        %v1802 = vld [vmem:[%s5 + $0x84] sm:$0xf]
        %v1803 = vld [vmem:[%s5 + $0x88] sm:$0xf]
        %v1804 = vld [vmem:[%s5 + $0x8c] sm:$0xf]
        %v1805 = vld [vmem:[%s5 + $0x90] sm:$0xf]
        %v1806 = vld [vmem:[%s5 + $0x94] sm:$0xf]
        %v1807 = vld [vmem:[%s5 + $0x98] sm:$0xf]
        %v1808 = vld [vmem:[%s5 + $0x9c] sm:$0xf]
        %v1809 = vld [vmem:[%s5 + $0xa0] sm:$0xf]
        %v1810 = vld [vmem:[%s5 + $0xa4] sm:$0xf]
        %v1811 = vld [vmem:[%s5 + $0xa8] sm:$0xf]
        %v1812 = vld [vmem:[%s5 + $0xac] sm:$0xf]
        %v1813 = vld [vmem:[%s5 + $0xb0] sm:$0xf]
        %v1814 = vld [vmem:[%s5 + $0xb4] sm:$0xf]
        %v1815 = vld [vmem:[%s5 + $0xb8] sm:$0xf]
        %v1816 = vld [vmem:[%s5 + $0xbc] sm:$0xf]
        %v1817 = vld [vmem:[%s5 + $0xc0] sm:$0xf]
        %v1818 = vld [vmem:[%s5 + $0xc4] sm:$0xf]
        %v1819 = vld [vmem:[%s5 + $0xc8] sm:$0xf]
        %v1820 = vld [vmem:[%s5 + $0xcc] sm:$0xf]
        %v1821 = vld [vmem:[%s5 + $0xd0] sm:$0xf]
        %v1822 = vld [vmem:[%s5 + $0xd4] sm:$0xf]
        %v1823 = vld [vmem:[%s5 + $0xd8] sm:$0xf]
        %v1824 = vld [vmem:[%s5 + $0xdc] sm:$0xf]
        %v1825 = vld [vmem:[%s5 + $0xe0] sm:$0xf]
        %v1826 = vld [vmem:[%s5 + $0xe4] sm:$0xf]
        %v1827 = vld [vmem:[%s5 + $0xe8] sm:$0xf]
        %v1828 = vld [vmem:[%s5 + $0xec] sm:$0xf]
        %v1829 = vld [vmem:[%s5 + $0xf0] sm:$0xf]
        %v1830 = vld [vmem:[%s5 + $0xf4] sm:$0xf]
        %v1831 = vld [vmem:[%s5 + $0xf8] sm:$0xf]
        %v1832 = vld [vmem:[%s5 + $0xfc] sm:$0xf]
        %v1833 = vld [vmem:[%s5 + $0x100] sm:$0xf]
        %v1834 = vld [vmem:[%s5 + $0x104] sm:$0xf]
        %v1835 = vld [vmem:[%s5 + $0x108] sm:$0xf]
        %v1836 = vld [vmem:[%s5 + $0x10c] sm:$0xf]
        %v1837 = vld [vmem:[%s5 + $0x110] sm:$0xf]
        %v1838 = vld [vmem:[%s5 + $0x114] sm:$0xf]
        %v1839 = vld [vmem:[%s5 + $0x118] sm:$0xf]
        %v1840 = vld [vmem:[%s5 + $0x11c] sm:$0xf]
        %v1842 = vperm.slane %v1557, 0
        %v1916 = vunpack.c.l.b16 %v1769
        %v1917 = vunpack.c.l.b16 %v1770
        %v1918 = vunpack.c.l.b16 %v1771
        %v1919 = vunpack.c.l.b16 %v1772
        %v1920 = vunpack.c.l.b16 %v1773
        %v1921 = vunpack.c.l.b16 %v1774
        %v1922 = vunpack.c.l.b16 %v1775
        %v1923 = vunpack.c.l.b16 %v1776
        %v1924 = vunpack.c.l.b16 %v1777
        %v1925 = vunpack.c.l.b16 %v1778
        %v1926 = vunpack.c.l.b16 %v1779
        %v1927 = vunpack.c.l.b16 %v1780
        %v1928 = vunpack.c.l.b16 %v1781
        %v1929 = vunpack.c.l.b16 %v1782
        %v1930 = vunpack.c.l.b16 %v1783
        %v1931 = vunpack.c.l.b16 %v1784
        %v1932 = vunpack.c.l.b16 %v1785
        %v1933 = vunpack.c.l.b16 %v1786
        %v1934 = vunpack.c.l.b16 %v1787
        %v1935 = vunpack.c.l.b16 %v1788
        %v1936 = vunpack.c.l.b16 %v1789
        %v1937 = vunpack.c.l.b16 %v1790
        %v1938 = vunpack.c.l.b16 %v1791
        %v1939 = vunpack.c.l.b16 %v1792
        %v1940 = vunpack.c.l.b16 %v1793
        %v1941 = vunpack.c.l.b16 %v1794
        %v1942 = vunpack.c.l.b16 %v1795
        %v1943 = vunpack.c.l.b16 %v1796
        %v1944 = vunpack.c.l.b16 %v1797
        %v1945 = vunpack.c.l.b16 %v1798
        %v1946 = vunpack.c.l.b16 %v1799
        %v1947 = vunpack.c.l.b16 %v1800
        %v1948 = vunpack.c.l.b16 %v1801
        %v1949 = vunpack.c.l.b16 %v1802
        %v1950 = vunpack.c.l.b16 %v1803
        %v1951 = vunpack.c.l.b16 %v1804
        %v1952 = vunpack.c.l.b16 %v1805
        %v1953 = vunpack.c.l.b16 %v1806
        %v1954 = vunpack.c.l.b16 %v1807
        %v1955 = vunpack.c.l.b16 %v1808
        %v1956 = vunpack.c.l.b16 %v1809
        %v1957 = vunpack.c.l.b16 %v1810
        %v1958 = vunpack.c.l.b16 %v1811
        %v1959 = vunpack.c.l.b16 %v1812
        %v1960 = vunpack.c.l.b16 %v1813
        %v1961 = vunpack.c.l.b16 %v1814
        %v1962 = vunpack.c.l.b16 %v1815
        %v1963 = vunpack.c.l.b16 %v1816
        %v1964 = vunpack.c.l.b16 %v1817
        %v1965 = vunpack.c.l.b16 %v1818
        %v1966 = vunpack.c.l.b16 %v1819
        %v1967 = vunpack.c.l.b16 %v1820
        %v1968 = vunpack.c.l.b16 %v1821
        %v1969 = vunpack.c.l.b16 %v1822
        %v1970 = vunpack.c.l.b16 %v1823
        %v1971 = vunpack.c.l.b16 %v1824
        %v1972 = vunpack.c.l.b16 %v1825
        %v1973 = vunpack.c.l.b16 %v1826
        %v1974 = vunpack.c.l.b16 %v1827
        %v1975 = vunpack.c.l.b16 %v1828
        %v1976 = vunpack.c.l.b16 %v1829
        %v1977 = vunpack.c.l.b16 %v1830
        %v1978 = vunpack.c.l.b16 %v1831
        %v1979 = vunpack.c.l.b16 %v1832
        %v1980 = vunpack.c.l.b16 %v1833
        %v1981 = vunpack.c.l.b16 %v1834
        %v1982 = vunpack.c.l.b16 %v1835
        %v1983 = vunpack.c.l.b16 %v1836
        %v1984 = vunpack.c.l.b16 %v1837
        %v1985 = vunpack.c.l.b16 %v1838
        %v1986 = vunpack.c.l.b16 %v1839
        %v1987 = vunpack.c.l.b16 %v1840
        %v1988 = vpack.c.b16 %v1917, %v1916
        %v1989 = vpack.c.b16 %v1919, %v1918
        %v1990 = vpack.c.b16 %v1921, %v1920
        %v1991 = vpack.c.b16 %v1923, %v1922
        %v1992 = vpack.c.b16 %v1925, %v1924
        %v1993 = vpack.c.b16 %v1927, %v1926
        %v1994 = vpack.c.b16 %v1929, %v1928
        %v1995 = vpack.c.b16 %v1931, %v1930
        %v1996 = vpack.c.b16 %v1933, %v1932
        %v1997 = vpack.c.b16 %v1935, %v1934
        %v1998 = vpack.c.b16 %v1937, %v1936
        %v1999 = vpack.c.b16 %v1939, %v1938
        %v2000 = vpack.c.b16 %v1941, %v1940
        %v2001 = vpack.c.b16 %v1943, %v1942
        %v2002 = vpack.c.b16 %v1945, %v1944
        %v2003 = vpack.c.b16 %v1947, %v1946
        %v2004 = vpack.c.b16 %v1949, %v1948
        %v2005 = vpack.c.b16 %v1951, %v1950
        %v2006 = vpack.c.b16 %v1953, %v1952
        %v2007 = vpack.c.b16 %v1955, %v1954
        %v2008 = vpack.c.b16 %v1957, %v1956
        %v2009 = vpack.c.b16 %v1959, %v1958
        %v2010 = vpack.c.b16 %v1961, %v1960
        %v2011 = vpack.c.b16 %v1963, %v1962
        %v2012 = vpack.c.b16 %v1965, %v1964
        %v2013 = vpack.c.b16 %v1967, %v1966
        %v2014 = vpack.c.b16 %v1969, %v1968
        %v2015 = vpack.c.b16 %v1971, %v1970
        %v2016 = vpack.c.b16 %v1973, %v1972
        %v2017 = vpack.c.b16 %v1975, %v1974
        %v2018 = vpack.c.b16 %v1977, %v1976
        %v2019 = vpack.c.b16 %v1979, %v1978
        %v2020 = vpack.c.b16 %v1981, %v1980
        %v2021 = vpack.c.b16 %v1983, %v1982
        %v2022 = vpack.c.b16 %v1985, %v1984
        %v2023 = vpack.c.b16 %v1987, %v1986
        %v2061 = vsel %vm1501, %v1758, 0
        %v2064 = vsel %vm1501, %v1763, 0
        %v2067 = vsel %vm1501, %v1768, 0
        %2069 = vmatpush.bf16.msra.mxu0 %v1995
        %2070 = vmatpush.bf16.msra.mxu0 %v1994
        %2071 = vmatpush.bf16.msra.mxu0 %v1993
        %2072 = vmatpush.bf16.msra.mxu0 %v1992
        %2073 = vmatpush.bf16.msra.mxu0 %v1991
        %2074 = vmatpush.bf16.msra.mxu0 %v1990
        %2075 = vmatpush.bf16.msra.mxu0 %v1989
        %2076 = vmatpush.bf16.msra.mxu0 %v1988
        %2077 = vmatmul.bf16.gmra.mxu0 %v1754
        %v2078 = vpop.f32.mrf.mxu0
        %v2079 = vadd.f32 %v1842, %v2078
        %v2080 = vpop.f32.mrf.mxu0
        %v2081 = vadd.f32 %v1842, %v2080
        %2082 = vmatmul.bf16.gmra.mxu0 %v1759
        %v2083 = vpop.f32.mrf.mxu0
        %v2084 = vadd.f32 %v1842, %v2083
        %v2085 = vpop.f32.mrf.mxu0
        %v2086 = vadd.f32 %v1842, %v2085
        %2087 = vmatmul.bf16.gmra.mxu0 %v1764
        %v2088 = vpop.f32.mrf.mxu0
        %v2089 = vadd.f32 %v1842, %v2088
        %v2090 = vpop.f32.mrf.mxu0
        %2091 = vdwg.mxu0
        %2092 = vmatpush.bf16.msra.mxu0 %v2003
        %2093 = vmatpush.bf16.msra.mxu0 %v2002
        %2094 = vmatpush.bf16.msra.mxu0 %v2001
        %2095 = vmatpush.bf16.msra.mxu0 %v2000
        %2096 = vmatpush.bf16.msra.mxu0 %v1999
        %2097 = vmatpush.bf16.msra.mxu0 %v1998
        %2098 = vmatpush.bf16.msra.mxu0 %v1997
        %2099 = vmatpush.bf16.msra.mxu0 %v1996
        %2100 = vmatmul.bf16.gmra.mxu0 %v1755
        %v2101 = vpop.f32.mrf.mxu0
        %v2102 = vadd.f32 %v2079, %v2101
        %v2103 = vpop.f32.mrf.mxu0
        %v2104 = vadd.f32 %v2081, %v2103
        %2105 = vmatmul.bf16.gmra.mxu0 %v1760
        %v2106 = vpop.f32.mrf.mxu0
        %v2107 = vadd.f32 %v2084, %v2106
        %v2108 = vpop.f32.mrf.mxu0
        %v2109 = vadd.f32 %v2086, %v2108
        %2110 = vmatmul.bf16.gmra.mxu0 %v1765
        %v2111 = vpop.f32.mrf.mxu0
        %v2112 = vadd.f32 %v2089, %v2111
        %v2113 = vpop.f32.mrf.mxu0
        %2114 = vdwg.mxu0
        %2115 = vmatpush.bf16.msra.mxu0 %v2011
        %2116 = vmatpush.bf16.msra.mxu0 %v2010
        %2117 = vmatpush.bf16.msra.mxu0 %v2009
        %2118 = vmatpush.bf16.msra.mxu0 %v2008
        %2119 = vmatpush.bf16.msra.mxu0 %v2007
        %2120 = vmatpush.bf16.msra.mxu0 %v2006
        %2121 = vmatpush.bf16.msra.mxu0 %v2005
        %2122 = vmatpush.bf16.msra.mxu0 %v2004
        %2123 = vmatmul.bf16.gmra.mxu0 %v1756
        %v2124 = vpop.f32.mrf.mxu0
        %v2125 = vadd.f32 %v2102, %v2124
        %v2126 = vpop.f32.mrf.mxu0
        %v2127 = vadd.f32 %v2104, %v2126
        %2128 = vmatmul.bf16.gmra.mxu0 %v1761
        %v2129 = vpop.f32.mrf.mxu0
        %v2130 = vadd.f32 %v2107, %v2129
        %v2131 = vpop.f32.mrf.mxu0
        %v2132 = vadd.f32 %v2109, %v2131
        %2133 = vmatmul.bf16.gmra.mxu0 %v1766
        %v2134 = vpop.f32.mrf.mxu0
        %v2135 = vadd.f32 %v2112, %v2134
        %v2136 = vpop.f32.mrf.mxu0
        %2137 = vdwg.mxu0
        %2138 = vmatpush.bf16.msra.mxu0 %v2019
        %2139 = vmatpush.bf16.msra.mxu0 %v2018
        %2140 = vmatpush.bf16.msra.mxu0 %v2017
        %2141 = vmatpush.bf16.msra.mxu0 %v2016
        %2142 = vmatpush.bf16.msra.mxu0 %v2015
        %2143 = vmatpush.bf16.msra.mxu0 %v2014
        %2144 = vmatpush.bf16.msra.mxu0 %v2013
        %2145 = vmatpush.bf16.msra.mxu0 %v2012
        %2146 = vmatmul.bf16.gmra.mxu0 %v1757
        %v2147 = vpop.f32.mrf.mxu0
        %v2148 = vadd.f32 %v2125, %v2147
        %v2149 = vpop.f32.mrf.mxu0
        %v2150 = vadd.f32 %v2127, %v2149
        %2151 = vmatmul.bf16.gmra.mxu0 %v1762
        %v2152 = vpop.f32.mrf.mxu0
        %v2153 = vadd.f32 %v2130, %v2152
        %v2154 = vpop.f32.mrf.mxu0
        %v2155 = vadd.f32 %v2132, %v2154
        %2156 = vmatmul.bf16.gmra.mxu0 %v1767
        %v2157 = vpop.f32.mrf.mxu0
        %v2158 = vadd.f32 %v2135, %v2157
        %v2159 = vpop.f32.mrf.mxu0
        %2160 = vdwg.mxu0
        %2161 = vmatpush.bf16.msra.mxu0 0
        %2162 = vmatpush.bf16.msra.mxu0 0
        %2163 = vmatpush.bf16.msra.mxu0 0
        %2164 = vmatpush.bf16.msra.mxu0 0
        %2165 = vmatpush.bf16.msra.mxu0 %v2023
        %2166 = vmatpush.bf16.msra.mxu0 %v2022
        %2167 = vmatpush.bf16.msra.mxu0 %v2021
        %2168 = vmatpush.bf16.msra.mxu0 %v2020
        %2169 = vmatmul.bf16.gmra.mxu0 %v2061
        %v2170 = vpop.f32.mrf.mxu0
        %v2171 = vadd.f32 %v2148, %v2170
        %v2172 = vpop.f32.mrf.mxu0
        %v2173 = vadd.f32 %v2150, %v2172
        %2174 = vmatmul.bf16.gmra.mxu0 %v2064
        %v2175 = vpop.f32.mrf.mxu0
        %v2176 = vadd.f32 %v2153, %v2175
        %v2177 = vpop.f32.mrf.mxu0
        %v2178 = vadd.f32 %v2155, %v2177
        %2179 = vmatmul.bf16.gmra.mxu0 %v2067
        %v2180 = vpop.f32.mrf.mxu0
        %v2181 = vadd.f32 %v2158, %v2180
        %v2182 = vpop.f32.mrf.mxu0
        %2183 = vdwg.mxu0
        %v2184 = vmax.f32 %v2171, 0.0
        %v2185 = vmax.f32 %v2173, 0.0
        %v2186 = vmax.f32 %v2176, 0.0
        %v2187 = vmax.f32 %v2178, 0.0
        %v2188 = vmax.f32 %v2181, 0.0
        %2189 = vst [vmem:[#allocation8] sm:$0xff] %v2184
        %2190 = vst [vmem:[#allocation8 + $0x8] sm:$0xff] %v2185
        %2191 = vst [vmem:[#allocation8 + $0x10] sm:$0xff] %v2186
        %2192 = vst [vmem:[#allocation8 + $0x18] sm:$0xff] %v2187
        %2193 = vst [vmem:[#allocation8 + $0x20] sm:$0xff] %v2188
        %2194 = vst [vmem:[#allocation9] sm:$0xff] 0.0
        %2195 = vst [vmem:[#allocation9 + $0x8] sm:$0x1f] 0.0
        loop: start=0, step=1, limit=2
        $region78: #{moe_forward_pallas.1} parent=55 // loop_pre_header
          _
        $region79: #{moe_forward_pallas.1} parent=55 // loop_header
          %s2197 = sphi 0, %s2201
          %p2198 = scmp.ge.s32.totalorder %s2197, 2
        $region80: #{moe_forward_pallas.1} parent=55 // loop_header_branch
          %2200 = sbr.rel (%p2198) target = $region84
        $region81: #{moe_forward_pallas.1} parent=55 // loop_body
          %s2202 = smul.u32 %s2197, 2
          %s2203 = sadd.s32 %s2202, 1
          %s2204 = smul.u32 %s2203, 6
          %s2205 = scalar_lea.vmem [#allocation8], %s2204
          %v2206 = vld [vmem:[%s2205] sm:$0x3f]
          %s2207 = sadd.s32 %s2204, 6
          %s2208 = scalar_lea.vmem [#allocation8], %s2207
          %v2209 = vld [vmem:[%s2208] sm:$0x3f]
          %v2210 = vmax.f32 %v2206, %v2209
          %2211 = vst [vmem:[#allocation10] sm:$0x3f] %v2210
          %s2212 = scalar_lea.vmem [#allocation10], 1
          %v2213 = vld [vmem:[%s2212] ss:$2 sm:$0x3]
          %s2214 = scalar_lea.vmem [#allocation10], 2
          %v2215 = vld [vmem:[%s2214] ss:$2 sm:$0x3]
          %s2216 = sadd.s32 %s2197, 1
          %s2217 = smul.u32 %s2216, 4
          %s2218 = sadd.s32 %s2217, 9
          %v2219 = vmax.f32 %v2213, %v2215
          %s2220 = scalar_lea.vmem [#allocation9], %s2218
          %2221 = vst [vmem:[%s2220] sm:$0x3] %v2219
          %s2222 = sadd.s32 %s2217, 11
          %s2223 = scalar_lea.vmem [#allocation9], %s2222
          %2224 = vst [vmem:[%s2223] sm:$0x3] 0.0
        $region82: #{moe_forward_pallas.1} parent=55 // loop_footer
          %s2201 = sadd.s32 1, %s2197
        $region83: #{moe_forward_pallas.1} parent=55 // loop_footer_branch
          %2196 = sbr.rel target = $region79
        $region84: #{moe_forward_pallas.1} parent=55 // loop_exit
          _
        %2225 = vst [vmem:[#allocation9 + $0x15] sm:$0xff] 0.0
        %2226 = vst [vmem:[#allocation9 + $0x1d] sm:$0x7] 0.0
        %v2227 = vld [vmem:[#allocation9 + $0xc] sm:$0xff]
        %v2228 = vrot.slane %v2227, 4
        %v2229 = vadd.f32 %v2227, %v2228
        %v2230 = vrot.slane %v2229, 2
        %v2231 = vadd.f32 %v2229, %v2230
        %v2232 = vrot.slane %v2231, 1
        %v2233 = vadd.f32 %v2231, %v2232
        %v2234 = vmul.f32 %v2233, 0.25
        %v2235 = vld [vmem:[%s7] sm:$0xff]
        %v2236 = vld [vmem:[%s7 + $0x8] sm:$0xff]
        %v2237 = vld [vmem:[%s7 + $0x10] sm:$0xff]
        %v2238 = vld [vmem:[%s7 + $0x18] sm:$0xff]
        %v2239 = vld [vmem:[%s7 + $0x20] sm:$0xff]
        %v2240 = vld [vmem:[%s7 + $0x28] sm:$0xff]
        %v2241 = vld [vmem:[%s7 + $0x30] sm:$0xff]
        %v2242 = vld [vmem:[%s7 + $0x38] sm:$0xff]
        %v2243 = vld [vmem:[%s7 + $0x40] sm:$0xff]
        %v2244 = vld [vmem:[%s7 + $0x48] sm:$0xff]
        %v2245 = vld [vmem:[%s7 + $0x50] sm:$0xff]
        %v2246 = vld [vmem:[%s7 + $0x58] sm:$0xff]
        %v2247 = vld [vmem:[%s7 + $0x60] sm:$0xff]
        %v2248 = vld [vmem:[%s7 + $0x68] sm:$0xff]
        %v2249 = vld [vmem:[%s7 + $0x70] sm:$0xff]
        %v2250 = vld [vmem:[%s7 + $0x78] sm:$0xff]
        %v2251 = vld [vmem:[%s8] sm:$0x1]
        %2252 = vmatpush.msra.mxu0 %v2250
        %2253 = vmatpush.msra.mxu0 %v2249
        %2254 = vmatpush.msra.mxu0 %v2248
        %2255 = vmatpush.msra.mxu0 %v2247
        %2256 = vmatpush.msra.mxu0 %v2246
        %2257 = vmatpush.msra.mxu0 %v2245
        %2258 = vmatpush.msra.mxu0 %v2244
        %2259 = vmatpush.msra.mxu0 %v2243
        %2260 = vmatpush.msra.mxu0 %v2242
        %2261 = vmatpush.msra.mxu0 %v2241
        %2262 = vmatpush.msra.mxu0 %v2240
        %2263 = vmatpush.msra.mxu0 %v2239
        %2264 = vmatpush.msra.mxu0 %v2238
        %2265 = vmatpush.msra.mxu0 %v2237
        %2266 = vmatpush.msra.mxu0 %v2236
        %2267 = vmatpush.msra.mxu0 %v2235
        %2268 = vmatmul.f32.gmra.mxu0 %v2234
        %v2269 = vpop.f32.mrf.mxu0
        %v2270 = vadd.f32 %v2251, %v2269
        %2271 = vdwg.mxu0
        %vm2272 = vcmask 40960
        %v2273 = vsel %vm2272, %v2270, -inf
        %2274 = vmax.xlane.f32.xlu0 %v2273
        %v2275 = vpop.xlane.xlu0 %2274
        %v2276 = vsub.f32 %v2270, %v2275
        %v2277 = vmul.f32 %v2276, 1.442695
        %v2278 = vpow.pop %v2277
        %v2279 = vsel %vm2272, %v2278, 0.0
        %2280 = vadd.xlane.f32.xlu0 %v2279
        %v2281 = vpop.xlane.xlu0 %2280
        %v2282 = vrcp.pop %v2281
        %v2283 = vmul.f32 %v2278, %v2282
        %2284 = vst.msk [vmem:[%s324] sm:$0x1] %vm2272, %v2283
        %s2285 = sand.u32 %s225, 1
        %s2286 = scalar_lea.sflag [#allocation12], %s2285
        %s2287 = sand.u32 %s225, 1
        %s2288 = scalar_lea.vmem [#allocation11], %s2287
        // Predicated region
        $region85: #{moe_forward_pallas.1} parent=55 // pred_check
          %p2289 = pneg %p235
        $region86: #{moe_forward_pallas.1} parent=55 // pred_check_branch
          %2291 = sbr.rel (%p2289) target = $region88
        $region87: #{moe_forward_pallas.1} parent=55 // pred_region
          %2293 = vsyncadd %s2286, 0
          %s2294 = scalar_lea.hbm %s9, %s23
          %s2296 = sshll.u32 %s2288, 4
          %s2297 = int_to_ptr.vmem [resolvable:$true] %s2296
          %s2298 = sshll.u32 %s2294, 4
          %s2299 = int_to_ptr.hbm [resolvable:$true] %s2298
          %2301 = dma.vmem_to_hbm [thread:$0]  %s2297, 16, %s2299, %s2286
        $region88: #{moe_forward_pallas.1} parent=55 // pred_fallthru
          _
      $region56: #{moe_forward_pallas.1} parent=5 // pred_fallthru
        _
      %p2302 = scmp.le.s32.totalorder 2, %s18
      // Predicated region
      $region89: #{moe_forward_pallas.1} parent=5 // pred_check
        %p2303 = pneg %p2302
      $region90: #{moe_forward_pallas.1} parent=5 // pred_check_branch
        %2305 = sbr.rel (%p2303) target = $region92
      $region91: #{moe_forward_pallas.1} parent=5 // pred_region
        %s2306 = ssub.s32 %s18, 2
        // Predicated region
        $region93: #{moe_forward_pallas.1} parent=91 // pred_check
          %p2307 = pneg %p241
        $region94: #{moe_forward_pallas.1} parent=91 // pred_check_branch
          %2309 = sbr.rel (%p2307) target = $region96
        $region95: #{moe_forward_pallas.1} parent=91 // pred_region
          %s2310 = sand.u32 %s226, 1
          %s2311 = scalar_lea.sflag [#allocation12], %s2310
          %s2312 = sand.u32 %s226, 1
          %s2313 = scalar_lea.vmem [#allocation11], %s2312
          %2315 = dma.done %s2311, 16
        $region96: #{moe_forward_pallas.1} parent=91 // pred_fallthru
          _
      $region92: #{moe_forward_pallas.1} parent=5 // pred_fallthru
        _
    $region6: #{moe_forward_pallas.1} parent=1 // loop_footer
      %s22 = sadd.s32 1, %s18
    $region7: #{moe_forward_pallas.1} parent=1 // loop_footer_branch
      %17 = sbr.rel target = $region3
    $region8: #{moe_forward_pallas.1} parent=1 // loop_exit
      _
    %2316 = vsyncpa [#allocation12], 1
    %s2317 = scalar_lea.sflag [#allocation12], 1
    %2318 = vsyncpa %s2317, 1

</llo_original>
